<compile_context>
chip_gen: v5e
topology: v5e:2x2
jax: 0.10.0
libtpu: 0.0.40
codegen_flags: <defaults>
</compile_context>

<pallas_src>
import jax
import jax.numpy as jnp
from jax.experimental import pallas as pl
from jax.experimental.pallas import tpu as pltpu

CANINE_EMBED_DIM = 768
QWEN2AUDIO_EMBEDDING_DIM = 4096
CANINE_REDUCE = "sum"
LN_EPS = 1e-12  # CANINE layer_norm_eps


def _round_up(x, m):
    return ((x + m - 1) // m) * m


# ---------------------------------------------------------------------------
# Kernel 1: fused char-table gather + pos/type add + LayerNorm + masked sum
#           over the char dimension.  char id == -1 marks padding.
# ---------------------------------------------------------------------------
def canine_gather_ln_reduce_kernel(ids_ref, tbl_ref, pos_type_ref,
                                   gamma_ref, beta_ref, out_ref):
    ids = ids_ref[...]                       # (t, L) int32, -1 = pad
    tbl = tbl_ref[...]                       # (V, D) f32, VMEM-resident
    pt = pos_type_ref[...]                   # (L, D) f32 (pos + type, precombined)
    gamma = gamma_ref[...]                   # (1, D)
    beta = beta_ref[...]                     # (1, D)
    t, L = ids.shape
    V, D = tbl.shape

    acc = jnp.zeros((t, D), jnp.float32)
    for l in range(L):                       # L == 8, static unroll (all ops 2-D)
        idl = ids[:, l:l + 1]                                        # (t, 1)
        onehot = (idl == jax.lax.broadcasted_iota(jnp.int32, (t, V), 1)
                  ).astype(jnp.float32)                              # (t, V)
        # gather-by-matmul on the MXU (exact: one-hot selects f32 table rows)
        x = jnp.dot(onehot, tbl, preferred_element_type=jnp.float32)  # (t, D)
        x = x + pt[l:l + 1, :]                                       # pos + type
        # LayerNorm (f32)
        mean = jnp.mean(x, axis=-1, keepdims=True)
        var = jnp.mean(jnp.square(x - mean), axis=-1, keepdims=True)
        xn = (x - mean) * jax.lax.rsqrt(var + LN_EPS)
        xn = xn * gamma + beta
        # masked sum (CANINE_REDUCE == 'sum'); pad chars (id == -1) contribute 0
        valid = (idl >= 0).astype(jnp.float32)                       # (t, 1)
        acc = acc + xn * valid
    out_ref[...] = acc.astype(out_ref.dtype)


def canine_reduce(char_ids, char_table, pos_type, gamma, beta, *, tile_nr=256):
    """char_ids: [NR, L] int32 (-1 = pad) -> [NR, D] bf16 reduced embeddings."""
    NR, L = char_ids.shape
    V, D = char_table.shape

    unit = 16                                   # bf16-output sublane packing
    NRu = _round_up(NR, unit)
    t = min(tile_nr, NRu)
    if t == NRu and NRu >= 2 * unit:
        t = _round_up(NRu // 2, unit)           # >=2 "parallel" steps (v7x 2 TCs)
    NRp = _round_up(NR, t)
    if NRp != NR:
        char_ids = jnp.pad(char_ids, ((0, NRp - NR), (0, 0)), constant_values=-1)

    out = pl.pallas_call(
        canine_gather_ln_reduce_kernel,
        out_shape=jax.ShapeDtypeStruct((NRp, D), jnp.bfloat16),
        grid=(NRp // t,),
        in_specs=[
            pl.BlockSpec((t, L), lambda i: (i, 0)),      # char ids (only HBM stream)
            pl.BlockSpec((V, D), lambda i: (0, 0)),      # char table, VMEM-resident
            pl.BlockSpec((L, D), lambda i: (0, 0)),      # pos+type, VMEM-resident
            pl.BlockSpec((1, D), lambda i: (0, 0)),      # gamma
            pl.BlockSpec((1, D), lambda i: (0, 0)),      # beta
        ],
        out_specs=pl.BlockSpec((t, D), lambda i: (i, 0)),
        compiler_params=pltpu.CompilerParams(dimension_semantics=("parallel",)),
    )(char_ids, char_table, pos_type, gamma, beta)
    return out[:NR]


# ---------------------------------------------------------------------------
# Kernel 2: split projection  out = x_lm @ W_lm + x_can @ W_can + b
# (replaces concat([h, h_canine]) @ W + b without materializing the concat).
# K is NOT tiled: both weight halves are fully VMEM-resident.
# ---------------------------------------------------------------------------
def proj_kernel(x_lm_ref, w_lm_ref, x_can_ref, w_can_ref, b_ref, o_ref):
    acc = jnp.dot(x_lm_ref[...], w_lm_ref[...], preferred_element_type=jnp.float32)
    acc = acc + jnp.dot(x_can_ref[...], w_can_ref[...],
                        preferred_element_type=jnp.float32)
    o_ref[...] = (acc + b_ref[...]).astype(o_ref.dtype)


def fused_proj(x_lm, x_can, w_lm, w_can, b, n_out, *, tile_m=256):
    """x_lm: [M, K_lm] bf16, x_can: [M, K_can] bf16, weights pre-padded bf16.
    Returns [M, n_out] f32."""
    M, K_lm = x_lm.shape
    Mc, K_can = x_can.shape
    assert M == Mc
    assert w_lm.shape[0] == K_lm and w_can.shape[0] == K_can
    Np = w_lm.shape[1]
    assert w_can.shape[1] == Np and b.shape == (1, Np)
    assert K_lm % 128 == 0 and K_can % 128 == 0 and Np % 128 == 0

    unit = 16                                   # bf16 sublane packing
    Mu = _round_up(M, unit)
    tm = min(tile_m, Mu)
    if tm == Mu and Mu >= 2 * unit:
        tm = _round_up(Mu // 2, unit)           # >=2 "parallel" steps when possible
    Mp = _round_up(M, tm)
    if Mp != M:
        x_lm = jnp.pad(x_lm, ((0, Mp - M), (0, 0)))
        x_can = jnp.pad(x_can, ((0, Mp - M), (0, 0)))

    # TODO(synk): for large embed_dim (Np*K_lm bf16 no longer VMEM-resident),
    # re-introduce N and/or K tiling with an f32 accumulator scratch.
    out = pl.pallas_call(
        proj_kernel,
        out_shape=jax.ShapeDtypeStruct((Mp, Np), jnp.float32),
        grid=(Mp // tm,),
        in_specs=[
            pl.BlockSpec((tm, K_lm), lambda i: (i, 0)),   # x_lm (streamed per M tile)
            pl.BlockSpec((K_lm, Np), lambda i: (0, 0)),   # W_lm (VMEM-resident)
            pl.BlockSpec((tm, K_can), lambda i: (i, 0)),  # x_can
            pl.BlockSpec((K_can, Np), lambda i: (0, 0)),  # W_can (VMEM-resident)
            pl.BlockSpec((1, Np), lambda i: (0, 0)),      # bias
        ],
        out_specs=pl.BlockSpec((tm, Np), lambda i: (i, 0)),
        compiler_params=pltpu.CompilerParams(dimension_semantics=("parallel",)),
    )(x_lm, w_lm, x_can, w_can, b)
    return out[:M, :n_out]


# ---------------------------------------------------------------------------
# Module wrapper (parameter setup + glue in plain JAX)
# ---------------------------------------------------------------------------
class Qwen2AudioPallas:
    def __init__(self, embed_dim, key, token_vocab=64, char_vocab=128, max_char_len=8):
        self.embed_dim = embed_dim
        self.token_vocab = token_vocab
        self.char_vocab = char_vocab
        self.max_char_len = max_char_len
        feature_dim = QWEN2AUDIO_EMBEDDING_DIM + CANINE_EMBED_DIM  # USE_CANINE = True

        ks = jax.random.split(key, 8)
        # TODO(synk): deterministic stand-in for the frozen Qwen2Audio LM's last hidden state.
        self.lm_table = 0.02 * jax.random.normal(
            ks[0], (token_vocab, QWEN2AUDIO_EMBEDDING_DIM), jnp.float32)
        # TODO(synk): CANINE hash-bucket shard embeddings replaced by a single small char table.
        self.char_table = 0.02 * jax.random.normal(
            ks[1], (char_vocab, CANINE_EMBED_DIM), jnp.float32)
        self.pos_table = 0.02 * jax.random.normal(
            ks[2], (max_char_len, CANINE_EMBED_DIM), jnp.float32)
        self.type_table = 0.02 * jax.random.normal(
            ks[3], (1, CANINE_EMBED_DIM), jnp.float32)
        # pos + type are added to every char position -> precombine once.
        self.pos_type = (self.pos_table + self.type_table).astype(jnp.float32)  # (L, 768)
        self.ln_gamma = jnp.ones((1, CANINE_EMBED_DIM), jnp.float32)
        self.ln_beta = jnp.zeros((1, CANINE_EMBED_DIM), jnp.float32)

        # nn.Linear(feature_dim, embed_dim)
        bound = 1.0 / jnp.sqrt(jnp.float32(feature_dim))
        self.proj_w = jax.random.uniform(
            ks[4], (feature_dim, embed_dim), jnp.float32, -bound, bound)
        self.proj_b = jax.random.uniform(
            ks[5], (embed_dim,), jnp.float32, -bound, bound)

        # ---- hoisted kernel-2 operand prep (split / pad / bf16 cast, once) ----
        Np = _round_up(embed_dim, 128)
        w_lm = self.proj_w[:QWEN2AUDIO_EMBEDDING_DIM]
        w_can = self.proj_w[QWEN2AUDIO_EMBEDDING_DIM:]
        b = self.proj_b
        if Np != embed_dim:
            w_lm = jnp.pad(w_lm, ((0, 0), (0, Np - embed_dim)))
            w_can = jnp.pad(w_can, ((0, 0), (0, Np - embed_dim)))
            b = jnp.pad(b, ((0, Np - embed_dim),))
        self.w_lm_bf16 = w_lm.astype(jnp.bfloat16)     # (4096, Np)
        self.w_can_bf16 = w_can.astype(jnp.bfloat16)   # (768, Np)
        self.b_pad = b.reshape(1, Np).astype(jnp.float32)

    def _synth_char_ids(self, src_flat):
        # TODO(synk): stand-in for host-side tokenizer.decode(token) + [ord(c) for c in text].
        L = self.max_char_len
        lens = (src_flat % 5) + 1                                   # 1..5 chars per token
        j = jnp.arange(L)
        char_ids = (src_flat[:, None] * 7 + j[None, :] * 13) % self.char_vocab
        # -1 sentinel marks padding; kernel 1 derives the mask from it.
        char_ids = jnp.where(j[None, :] < lens[:, None], char_ids, -1)
        return char_ids.astype(jnp.int32)

    def __call__(self, src):
        if src.ndim == 1:
            src = src[None, :]
        assert src.ndim == 2, "src.shape should be [bs, sq]"
        bs, sq = src.shape

        # ---- stand-in for Qwen2Audio forward with output_hidden_states=True ----
        h = jnp.take(self.lm_table, src, axis=0)                    # [bs, sq, 4096] f32

        # ---- CANINE path: fused gather + LN + masked sum (kernel 1) ----
        src_flat = src.reshape(-1)                                  # [bs*sq]
        char_ids = self._synth_char_ids(src_flat)                   # [N, L] int32
        h_canine = canine_reduce(char_ids, self.char_table, self.pos_type,
                                 self.ln_gamma, self.ln_beta)       # [N, 768] bf16

        # ---- split projection (no HBM concat), kernel 2 ----
        h_lm = h.reshape(bs * sq, QWEN2AUDIO_EMBEDDING_DIM).astype(jnp.bfloat16)
        out = fused_proj(h_lm, h_canine, self.w_lm_bf16, self.w_can_bf16,
                         self.b_pad, self.embed_dim)                # [bs*sq, embed_dim] f32
        return out.reshape(bs, sq, self.embed_dim)


if __name__ == "__main__":
    key = jax.random.PRNGKey(0)
    k_param, k_src = jax.random.split(key)

    bs, sq, embed_dim = 2, 8, 256
    model = Qwen2AudioPallas(embed_dim=embed_dim, key=k_param)

    src = jax.random.randint(k_src, (bs, sq), 0, model.token_vocab, dtype=jnp.int32)
    out = model(src)
    out = jax.block_until_ready(out)

    assert out.shape == (bs, sq, embed_dim)
    assert out.dtype == jnp.float32
    assert bool(jnp.all(jnp.isfinite(out)))
    print("KERNEL_OK")
</pallas_src>

<mosaic_0001>
module attributes {stable_mosaic.version = 11 : i64} {
  func.func @canine_gather_ln_reduce_kernel(%arg0: i32, %arg1: memref<16x8xi32, #tpu.memory_space<vmem>>, %arg2: memref<128x768xf32, #tpu.memory_space<vmem>>, %arg3: memref<8x768xf32, #tpu.memory_space<vmem>>, %arg4: memref<1x768xf32, #tpu.memory_space<vmem>>, %arg5: memref<1x768xf32, #tpu.memory_space<vmem>>, %arg6: memref<16x768xbf16, #tpu.memory_space<vmem>>) attributes {dimension_semantics = [#tpu.dimension_semantics<parallel>], iteration_bounds = array<i64: 1>, scalar_prefetch = 0 : i64, scratch_operands = 0 : i64, tpu.core_type = #tpu.core_type<tc>, window_params = [{transform_indices = @transform_0, window_bounds = array<i64: 16, 8>}, {pipeline_mode = #tpu.pipeline_mode<synchronous>, transform_indices = @transform_1, window_bounds = array<i64: 128, 768>}, {pipeline_mode = #tpu.pipeline_mode<synchronous>, transform_indices = @transform_2, window_bounds = array<i64: 8, 768>}, {pipeline_mode = #tpu.pipeline_mode<synchronous>, transform_indices = @transform_3, window_bounds = array<i64: 1, 768>}, {pipeline_mode = #tpu.pipeline_mode<synchronous>, transform_indices = @transform_4, window_bounds = array<i64: 1, 768>}, {transform_indices = @transform_5, window_bounds = array<i64: 16, 768>}]} {
    %c0 = arith.constant 0 : index
    %c0_0 = arith.constant 0 : index
    %0 = vector.load %arg1[%c0, %c0_0] : memref<16x8xi32, #tpu.memory_space<vmem>>, vector<16x8xi32>
    %c0_1 = arith.constant 0 : index
    %c0_2 = arith.constant 0 : index
    %1 = vector.load %arg2[%c0_1, %c0_2] : memref<128x768xf32, #tpu.memory_space<vmem>>, vector<128x768xf32>
    %c0_3 = arith.constant 0 : index
    %c0_4 = arith.constant 0 : index
    %2 = vector.load %arg3[%c0_3, %c0_4] : memref<8x768xf32, #tpu.memory_space<vmem>>, vector<8x768xf32>
    %c0_5 = arith.constant 0 : index
    %c0_6 = arith.constant 0 : index
    %3 = vector.load %arg4[%c0_5, %c0_6] : memref<1x768xf32, #tpu.memory_space<vmem>>, vector<1x768xf32>
    %c0_7 = arith.constant 0 : index
    %c0_8 = arith.constant 0 : index
    %4 = vector.load %arg5[%c0_7, %c0_8] : memref<1x768xf32, #tpu.memory_space<vmem>>, vector<1x768xf32>
    %cst = arith.constant 0.000000e+00 : f32
    %5 = vector.broadcast %cst : f32 to vector<16x768xf32>
    %6 = vector.extract_strided_slice %0 {offsets = [0, 0], sizes = [16, 1], strides = [1, 1]} : vector<16x8xi32> to vector<16x1xi32>
    %7 = tpu.iota {dimensions = array<i32: 1>} : vector<16x128xi32>
    %8 = vector.broadcast %6 : vector<16x1xi32> to vector<16x128xi32>
    %9 = arith.cmpi eq, %8, %7 : vector<16x128xi32>
    %10 = arith.extui %9 : vector<16x128xi1> to vector<16x128xi32>
    %11 = arith.sitofp %10 : vector<16x128xi32> to vector<16x128xf32>
    %cst_9 = arith.constant dense<0.000000e+00> : vector<16x768xf32>
    %12 = tpu.matmul %11, %1, %cst_9 {dimension_numbers = #tpu.dot_dimension_numbers<[1], [0], [0], [1], [0, 0, 1, 1], [], []>} : vector<16x128xf32>, vector<128x768xf32>, vector<16x768xf32> -> vector<16x768xf32>
    %13 = vector.extract_strided_slice %2 {offsets = [0, 0], sizes = [1, 768], strides = [1, 1]} : vector<8x768xf32> to vector<1x768xf32>
    %14 = vector.broadcast %13 : vector<1x768xf32> to vector<16x768xf32>
    %15 = arith.addf %12, %14 : vector<16x768xf32>
    %cst_10 = arith.constant dense<0.000000e+00> : vector<16xf32>
    %16 = vector.multi_reduction <add>, %15, %cst_10 [1] : vector<16x768xf32> to vector<16xf32>
    %17 = vector.shape_cast %16 : vector<16xf32> to vector<16x1xf32>
    %cst_11 = arith.constant 7.680000e+02 : f32
    %18 = vector.broadcast %cst_11 : f32 to vector<16x1xf32>
    %19 = arith.divf %17, %18 : vector<16x1xf32>
    %20 = vector.broadcast %19 : vector<16x1xf32> to vector<16x768xf32>
    %21 = arith.subf %15, %20 : vector<16x768xf32>
    %22 = arith.mulf %21, %21 : vector<16x768xf32>
    %cst_12 = arith.constant dense<0.000000e+00> : vector<16xf32>
    %23 = vector.multi_reduction <add>, %22, %cst_12 [1] : vector<16x768xf32> to vector<16xf32>
    %24 = vector.shape_cast %23 : vector<16xf32> to vector<16x1xf32>
    %cst_13 = arith.constant 7.680000e+02 : f32
    %25 = vector.broadcast %cst_13 : f32 to vector<16x1xf32>
    %26 = arith.divf %24, %25 : vector<16x1xf32>
    %27 = vector.broadcast %19 : vector<16x1xf32> to vector<16x768xf32>
    %28 = arith.subf %15, %27 : vector<16x768xf32>
    %cst_14 = arith.constant 9.99999996E-13 : f32
    %29 = vector.broadcast %cst_14 : f32 to vector<16x1xf32>
    %30 = arith.addf %26, %29 : vector<16x1xf32>
    %31 = math.rsqrt %30 : vector<16x1xf32>
    %32 = vector.broadcast %31 : vector<16x1xf32> to vector<16x768xf32>
    %33 = arith.mulf %28, %32 : vector<16x768xf32>
    %34 = vector.broadcast %3 : vector<1x768xf32> to vector<16x768xf32>
    %35 = arith.mulf %33, %34 : vector<16x768xf32>
    %36 = vector.broadcast %4 : vector<1x768xf32> to vector<16x768xf32>
    %37 = arith.addf %35, %36 : vector<16x768xf32>
    %c0_i32 = arith.constant 0 : i32
    %38 = vector.broadcast %c0_i32 : i32 to vector<16x1xi32>
    %39 = arith.cmpi sge, %6, %38 : vector<16x1xi32>
    %40 = arith.extui %39 : vector<16x1xi1> to vector<16x1xi32>
    %41 = arith.sitofp %40 : vector<16x1xi32> to vector<16x1xf32>
    %42 = vector.broadcast %41 : vector<16x1xf32> to vector<16x768xf32>
    %43 = arith.mulf %37, %42 : vector<16x768xf32>
    %44 = arith.addf %5, %43 : vector<16x768xf32>
    %45 = vector.extract_strided_slice %0 {offsets = [0, 1], sizes = [16, 1], strides = [1, 1]} : vector<16x8xi32> to vector<16x1xi32>
    %46 = tpu.iota {dimensions = array<i32: 1>} : vector<16x128xi32>
    %47 = vector.broadcast %45 : vector<16x1xi32> to vector<16x128xi32>
    %48 = arith.cmpi eq, %47, %46 : vector<16x128xi32>
    %49 = arith.extui %48 : vector<16x128xi1> to vector<16x128xi32>
    %50 = arith.sitofp %49 : vector<16x128xi32> to vector<16x128xf32>
    %cst_15 = arith.constant dense<0.000000e+00> : vector<16x768xf32>
    %51 = tpu.matmul %50, %1, %cst_15 {dimension_numbers = #tpu.dot_dimension_numbers<[1], [0], [0], [1], [0, 0, 1, 1], [], []>} : vector<16x128xf32>, vector<128x768xf32>, vector<16x768xf32> -> vector<16x768xf32>
    %52 = vector.extract_strided_slice %2 {offsets = [1, 0], sizes = [1, 768], strides = [1, 1]} : vector<8x768xf32> to vector<1x768xf32>
    %53 = vector.broadcast %52 : vector<1x768xf32> to vector<16x768xf32>
    %54 = arith.addf %51, %53 : vector<16x768xf32>
    %cst_16 = arith.constant dense<0.000000e+00> : vector<16xf32>
    %55 = vector.multi_reduction <add>, %54, %cst_16 [1] : vector<16x768xf32> to vector<16xf32>
    %56 = vector.shape_cast %55 : vector<16xf32> to vector<16x1xf32>
    %cst_17 = arith.constant 7.680000e+02 : f32
    %57 = vector.broadcast %cst_17 : f32 to vector<16x1xf32>
    %58 = arith.divf %56, %57 : vector<16x1xf32>
    %59 = vector.broadcast %58 : vector<16x1xf32> to vector<16x768xf32>
    %60 = arith.subf %54, %59 : vector<16x768xf32>
    %61 = arith.mulf %60, %60 : vector<16x768xf32>
    %cst_18 = arith.constant dense<0.000000e+00> : vector<16xf32>
    %62 = vector.multi_reduction <add>, %61, %cst_18 [1] : vector<16x768xf32> to vector<16xf32>
    %63 = vector.shape_cast %62 : vector<16xf32> to vector<16x1xf32>
    %cst_19 = arith.constant 7.680000e+02 : f32
    %64 = vector.broadcast %cst_19 : f32 to vector<16x1xf32>
    %65 = arith.divf %63, %64 : vector<16x1xf32>
    %66 = vector.broadcast %58 : vector<16x1xf32> to vector<16x768xf32>
    %67 = arith.subf %54, %66 : vector<16x768xf32>
    %cst_20 = arith.constant 9.99999996E-13 : f32
    %68 = vector.broadcast %cst_20 : f32 to vector<16x1xf32>
    %69 = arith.addf %65, %68 : vector<16x1xf32>
    %70 = math.rsqrt %69 : vector<16x1xf32>
    %71 = vector.broadcast %70 : vector<16x1xf32> to vector<16x768xf32>
    %72 = arith.mulf %67, %71 : vector<16x768xf32>
    %73 = vector.broadcast %3 : vector<1x768xf32> to vector<16x768xf32>
    %74 = arith.mulf %72, %73 : vector<16x768xf32>
    %75 = vector.broadcast %4 : vector<1x768xf32> to vector<16x768xf32>
    %76 = arith.addf %74, %75 : vector<16x768xf32>
    %c0_i32_21 = arith.constant 0 : i32
    %77 = vector.broadcast %c0_i32_21 : i32 to vector<16x1xi32>
    %78 = arith.cmpi sge, %45, %77 : vector<16x1xi32>
    %79 = arith.extui %78 : vector<16x1xi1> to vector<16x1xi32>
    %80 = arith.sitofp %79 : vector<16x1xi32> to vector<16x1xf32>
    %81 = vector.broadcast %80 : vector<16x1xf32> to vector<16x768xf32>
    %82 = arith.mulf %76, %81 : vector<16x768xf32>
    %83 = arith.addf %44, %82 : vector<16x768xf32>
    %84 = vector.extract_strided_slice %0 {offsets = [0, 2], sizes = [16, 1], strides = [1, 1]} : vector<16x8xi32> to vector<16x1xi32>
    %85 = tpu.iota {dimensions = array<i32: 1>} : vector<16x128xi32>
    %86 = vector.broadcast %84 : vector<16x1xi32> to vector<16x128xi32>
    %87 = arith.cmpi eq, %86, %85 : vector<16x128xi32>
    %88 = arith.extui %87 : vector<16x128xi1> to vector<16x128xi32>
    %89 = arith.sitofp %88 : vector<16x128xi32> to vector<16x128xf32>
    %cst_22 = arith.constant dense<0.000000e+00> : vector<16x768xf32>
    %90 = tpu.matmul %89, %1, %cst_22 {dimension_numbers = #tpu.dot_dimension_numbers<[1], [0], [0], [1], [0, 0, 1, 1], [], []>} : vector<16x128xf32>, vector<128x768xf32>, vector<16x768xf32> -> vector<16x768xf32>
    %91 = vector.extract_strided_slice %2 {offsets = [2, 0], sizes = [1, 768], strides = [1, 1]} : vector<8x768xf32> to vector<1x768xf32>
    %92 = vector.broadcast %91 : vector<1x768xf32> to vector<16x768xf32>
    %93 = arith.addf %90, %92 : vector<16x768xf32>
    %cst_23 = arith.constant dense<0.000000e+00> : vector<16xf32>
    %94 = vector.multi_reduction <add>, %93, %cst_23 [1] : vector<16x768xf32> to vector<16xf32>
    %95 = vector.shape_cast %94 : vector<16xf32> to vector<16x1xf32>
    %cst_24 = arith.constant 7.680000e+02 : f32
    %96 = vector.broadcast %cst_24 : f32 to vector<16x1xf32>
    %97 = arith.divf %95, %96 : vector<16x1xf32>
    %98 = vector.broadcast %97 : vector<16x1xf32> to vector<16x768xf32>
    %99 = arith.subf %93, %98 : vector<16x768xf32>
    %100 = arith.mulf %99, %99 : vector<16x768xf32>
    %cst_25 = arith.constant dense<0.000000e+00> : vector<16xf32>
    %101 = vector.multi_reduction <add>, %100, %cst_25 [1] : vector<16x768xf32> to vector<16xf32>
    %102 = vector.shape_cast %101 : vector<16xf32> to vector<16x1xf32>
    %cst_26 = arith.constant 7.680000e+02 : f32
    %103 = vector.broadcast %cst_26 : f32 to vector<16x1xf32>
    %104 = arith.divf %102, %103 : vector<16x1xf32>
    %105 = vector.broadcast %97 : vector<16x1xf32> to vector<16x768xf32>
    %106 = arith.subf %93, %105 : vector<16x768xf32>
    %cst_27 = arith.constant 9.99999996E-13 : f32
    %107 = vector.broadcast %cst_27 : f32 to vector<16x1xf32>
    %108 = arith.addf %104, %107 : vector<16x1xf32>
    %109 = math.rsqrt %108 : vector<16x1xf32>
    %110 = vector.broadcast %109 : vector<16x1xf32> to vector<16x768xf32>
    %111 = arith.mulf %106, %110 : vector<16x768xf32>
    %112 = vector.broadcast %3 : vector<1x768xf32> to vector<16x768xf32>
    %113 = arith.mulf %111, %112 : vector<16x768xf32>
    %114 = vector.broadcast %4 : vector<1x768xf32> to vector<16x768xf32>
    %115 = arith.addf %113, %114 : vector<16x768xf32>
    %c0_i32_28 = arith.constant 0 : i32
    %116 = vector.broadcast %c0_i32_28 : i32 to vector<16x1xi32>
    %117 = arith.cmpi sge, %84, %116 : vector<16x1xi32>
    %118 = arith.extui %117 : vector<16x1xi1> to vector<16x1xi32>
    %119 = arith.sitofp %118 : vector<16x1xi32> to vector<16x1xf32>
    %120 = vector.broadcast %119 : vector<16x1xf32> to vector<16x768xf32>
    %121 = arith.mulf %115, %120 : vector<16x768xf32>
    %122 = arith.addf %83, %121 : vector<16x768xf32>
    %123 = vector.extract_strided_slice %0 {offsets = [0, 3], sizes = [16, 1], strides = [1, 1]} : vector<16x8xi32> to vector<16x1xi32>
    %124 = tpu.iota {dimensions = array<i32: 1>} : vector<16x128xi32>
    %125 = vector.broadcast %123 : vector<16x1xi32> to vector<16x128xi32>
    %126 = arith.cmpi eq, %125, %124 : vector<16x128xi32>
    %127 = arith.extui %126 : vector<16x128xi1> to vector<16x128xi32>
    %128 = arith.sitofp %127 : vector<16x128xi32> to vector<16x128xf32>
    %cst_29 = arith.constant dense<0.000000e+00> : vector<16x768xf32>
    %129 = tpu.matmul %128, %1, %cst_29 {dimension_numbers = #tpu.dot_dimension_numbers<[1], [0], [0], [1], [0, 0, 1, 1], [], []>} : vector<16x128xf32>, vector<128x768xf32>, vector<16x768xf32> -> vector<16x768xf32>
    %130 = vector.extract_strided_slice %2 {offsets = [3, 0], sizes = [1, 768], strides = [1, 1]} : vector<8x768xf32> to vector<1x768xf32>
    %131 = vector.broadcast %130 : vector<1x768xf32> to vector<16x768xf32>
    %132 = arith.addf %129, %131 : vector<16x768xf32>
    %cst_30 = arith.constant dense<0.000000e+00> : vector<16xf32>
    %133 = vector.multi_reduction <add>, %132, %cst_30 [1] : vector<16x768xf32> to vector<16xf32>
    %134 = vector.shape_cast %133 : vector<16xf32> to vector<16x1xf32>
    %cst_31 = arith.constant 7.680000e+02 : f32
    %135 = vector.broadcast %cst_31 : f32 to vector<16x1xf32>
    %136 = arith.divf %134, %135 : vector<16x1xf32>
    %137 = vector.broadcast %136 : vector<16x1xf32> to vector<16x768xf32>
    %138 = arith.subf %132, %137 : vector<16x768xf32>
    %139 = arith.mulf %138, %138 : vector<16x768xf32>
    %cst_32 = arith.constant dense<0.000000e+00> : vector<16xf32>
    %140 = vector.multi_reduction <add>, %139, %cst_32 [1] : vector<16x768xf32> to vector<16xf32>
    %141 = vector.shape_cast %140 : vector<16xf32> to vector<16x1xf32>
    %cst_33 = arith.constant 7.680000e+02 : f32
    %142 = vector.broadcast %cst_33 : f32 to vector<16x1xf32>
    %143 = arith.divf %141, %142 : vector<16x1xf32>
    %144 = vector.broadcast %136 : vector<16x1xf32> to vector<16x768xf32>
    %145 = arith.subf %132, %144 : vector<16x768xf32>
    %cst_34 = arith.constant 9.99999996E-13 : f32
    %146 = vector.broadcast %cst_34 : f32 to vector<16x1xf32>
    %147 = arith.addf %143, %146 : vector<16x1xf32>
    %148 = math.rsqrt %147 : vector<16x1xf32>
    %149 = vector.broadcast %148 : vector<16x1xf32> to vector<16x768xf32>
    %150 = arith.mulf %145, %149 : vector<16x768xf32>
    %151 = vector.broadcast %3 : vector<1x768xf32> to vector<16x768xf32>
    %152 = arith.mulf %150, %151 : vector<16x768xf32>
    %153 = vector.broadcast %4 : vector<1x768xf32> to vector<16x768xf32>
    %154 = arith.addf %152, %153 : vector<16x768xf32>
    %c0_i32_35 = arith.constant 0 : i32
    %155 = vector.broadcast %c0_i32_35 : i32 to vector<16x1xi32>
    %156 = arith.cmpi sge, %123, %155 : vector<16x1xi32>
    %157 = arith.extui %156 : vector<16x1xi1> to vector<16x1xi32>
    %158 = arith.sitofp %157 : vector<16x1xi32> to vector<16x1xf32>
    %159 = vector.broadcast %158 : vector<16x1xf32> to vector<16x768xf32>
    %160 = arith.mulf %154, %159 : vector<16x768xf32>
    %161 = arith.addf %122, %160 : vector<16x768xf32>
    %162 = vector.extract_strided_slice %0 {offsets = [0, 4], sizes = [16, 1], strides = [1, 1]} : vector<16x8xi32> to vector<16x1xi32>
    %163 = tpu.iota {dimensions = array<i32: 1>} : vector<16x128xi32>
    %164 = vector.broadcast %162 : vector<16x1xi32> to vector<16x128xi32>
    %165 = arith.cmpi eq, %164, %163 : vector<16x128xi32>
    %166 = arith.extui %165 : vector<16x128xi1> to vector<16x128xi32>
    %167 = arith.sitofp %166 : vector<16x128xi32> to vector<16x128xf32>
    %cst_36 = arith.constant dense<0.000000e+00> : vector<16x768xf32>
    %168 = tpu.matmul %167, %1, %cst_36 {dimension_numbers = #tpu.dot_dimension_numbers<[1], [0], [0], [1], [0, 0, 1, 1], [], []>} : vector<16x128xf32>, vector<128x768xf32>, vector<16x768xf32> -> vector<16x768xf32>
    %169 = vector.extract_strided_slice %2 {offsets = [4, 0], sizes = [1, 768], strides = [1, 1]} : vector<8x768xf32> to vector<1x768xf32>
    %170 = vector.broadcast %169 : vector<1x768xf32> to vector<16x768xf32>
    %171 = arith.addf %168, %170 : vector<16x768xf32>
    %cst_37 = arith.constant dense<0.000000e+00> : vector<16xf32>
    %172 = vector.multi_reduction <add>, %171, %cst_37 [1] : vector<16x768xf32> to vector<16xf32>
    %173 = vector.shape_cast %172 : vector<16xf32> to vector<16x1xf32>
    %cst_38 = arith.constant 7.680000e+02 : f32
    %174 = vector.broadcast %cst_38 : f32 to vector<16x1xf32>
    %175 = arith.divf %173, %174 : vector<16x1xf32>
    %176 = vector.broadcast %175 : vector<16x1xf32> to vector<16x768xf32>
    %177 = arith.subf %171, %176 : vector<16x768xf32>
    %178 = arith.mulf %177, %177 : vector<16x768xf32>
    %cst_39 = arith.constant dense<0.000000e+00> : vector<16xf32>
    %179 = vector.multi_reduction <add>, %178, %cst_39 [1] : vector<16x768xf32> to vector<16xf32>
    %180 = vector.shape_cast %179 : vector<16xf32> to vector<16x1xf32>
    %cst_40 = arith.constant 7.680000e+02 : f32
    %181 = vector.broadcast %cst_40 : f32 to vector<16x1xf32>
    %182 = arith.divf %180, %181 : vector<16x1xf32>
    %183 = vector.broadcast %175 : vector<16x1xf32> to vector<16x768xf32>
    %184 = arith.subf %171, %183 : vector<16x768xf32>
    %cst_41 = arith.constant 9.99999996E-13 : f32
    %185 = vector.broadcast %cst_41 : f32 to vector<16x1xf32>
    %186 = arith.addf %182, %185 : vector<16x1xf32>
    %187 = math.rsqrt %186 : vector<16x1xf32>
    %188 = vector.broadcast %187 : vector<16x1xf32> to vector<16x768xf32>
    %189 = arith.mulf %184, %188 : vector<16x768xf32>
    %190 = vector.broadcast %3 : vector<1x768xf32> to vector<16x768xf32>
    %191 = arith.mulf %189, %190 : vector<16x768xf32>
    %192 = vector.broadcast %4 : vector<1x768xf32> to vector<16x768xf32>
    %193 = arith.addf %191, %192 : vector<16x768xf32>
    %c0_i32_42 = arith.constant 0 : i32
    %194 = vector.broadcast %c0_i32_42 : i32 to vector<16x1xi32>
    %195 = arith.cmpi sge, %162, %194 : vector<16x1xi32>
    %196 = arith.extui %195 : vector<16x1xi1> to vector<16x1xi32>
    %197 = arith.sitofp %196 : vector<16x1xi32> to vector<16x1xf32>
    %198 = vector.broadcast %197 : vector<16x1xf32> to vector<16x768xf32>
    %199 = arith.mulf %193, %198 : vector<16x768xf32>
    %200 = arith.addf %161, %199 : vector<16x768xf32>
    %201 = vector.extract_strided_slice %0 {offsets = [0, 5], sizes = [16, 1], strides = [1, 1]} : vector<16x8xi32> to vector<16x1xi32>
    %202 = tpu.iota {dimensions = array<i32: 1>} : vector<16x128xi32>
    %203 = vector.broadcast %201 : vector<16x1xi32> to vector<16x128xi32>
    %204 = arith.cmpi eq, %203, %202 : vector<16x128xi32>
    %205 = arith.extui %204 : vector<16x128xi1> to vector<16x128xi32>
    %206 = arith.sitofp %205 : vector<16x128xi32> to vector<16x128xf32>
    %cst_43 = arith.constant dense<0.000000e+00> : vector<16x768xf32>
    %207 = tpu.matmul %206, %1, %cst_43 {dimension_numbers = #tpu.dot_dimension_numbers<[1], [0], [0], [1], [0, 0, 1, 1], [], []>} : vector<16x128xf32>, vector<128x768xf32>, vector<16x768xf32> -> vector<16x768xf32>
    %208 = vector.extract_strided_slice %2 {offsets = [5, 0], sizes = [1, 768], strides = [1, 1]} : vector<8x768xf32> to vector<1x768xf32>
    %209 = vector.broadcast %208 : vector<1x768xf32> to vector<16x768xf32>
    %210 = arith.addf %207, %209 : vector<16x768xf32>
    %cst_44 = arith.constant dense<0.000000e+00> : vector<16xf32>
    %211 = vector.multi_reduction <add>, %210, %cst_44 [1] : vector<16x768xf32> to vector<16xf32>
    %212 = vector.shape_cast %211 : vector<16xf32> to vector<16x1xf32>
    %cst_45 = arith.constant 7.680000e+02 : f32
    %213 = vector.broadcast %cst_45 : f32 to vector<16x1xf32>
    %214 = arith.divf %212, %213 : vector<16x1xf32>
    %215 = vector.broadcast %214 : vector<16x1xf32> to vector<16x768xf32>
    %216 = arith.subf %210, %215 : vector<16x768xf32>
    %217 = arith.mulf %216, %216 : vector<16x768xf32>
    %cst_46 = arith.constant dense<0.000000e+00> : vector<16xf32>
    %218 = vector.multi_reduction <add>, %217, %cst_46 [1] : vector<16x768xf32> to vector<16xf32>
    %219 = vector.shape_cast %218 : vector<16xf32> to vector<16x1xf32>
    %cst_47 = arith.constant 7.680000e+02 : f32
    %220 = vector.broadcast %cst_47 : f32 to vector<16x1xf32>
    %221 = arith.divf %219, %220 : vector<16x1xf32>
    %222 = vector.broadcast %214 : vector<16x1xf32> to vector<16x768xf32>
    %223 = arith.subf %210, %222 : vector<16x768xf32>
    %cst_48 = arith.constant 9.99999996E-13 : f32
    %224 = vector.broadcast %cst_48 : f32 to vector<16x1xf32>
    %225 = arith.addf %221, %224 : vector<16x1xf32>
    %226 = math.rsqrt %225 : vector<16x1xf32>
    %227 = vector.broadcast %226 : vector<16x1xf32> to vector<16x768xf32>
    %228 = arith.mulf %223, %227 : vector<16x768xf32>
    %229 = vector.broadcast %3 : vector<1x768xf32> to vector<16x768xf32>
    %230 = arith.mulf %228, %229 : vector<16x768xf32>
    %231 = vector.broadcast %4 : vector<1x768xf32> to vector<16x768xf32>
    %232 = arith.addf %230, %231 : vector<16x768xf32>
    %c0_i32_49 = arith.constant 0 : i32
    %233 = vector.broadcast %c0_i32_49 : i32 to vector<16x1xi32>
    %234 = arith.cmpi sge, %201, %233 : vector<16x1xi32>
    %235 = arith.extui %234 : vector<16x1xi1> to vector<16x1xi32>
    %236 = arith.sitofp %235 : vector<16x1xi32> to vector<16x1xf32>
    %237 = vector.broadcast %236 : vector<16x1xf32> to vector<16x768xf32>
    %238 = arith.mulf %232, %237 : vector<16x768xf32>
    %239 = arith.addf %200, %238 : vector<16x768xf32>
    %240 = vector.extract_strided_slice %0 {offsets = [0, 6], sizes = [16, 1], strides = [1, 1]} : vector<16x8xi32> to vector<16x1xi32>
    %241 = tpu.iota {dimensions = array<i32: 1>} : vector<16x128xi32>
    %242 = vector.broadcast %240 : vector<16x1xi32> to vector<16x128xi32>
    %243 = arith.cmpi eq, %242, %241 : vector<16x128xi32>
    %244 = arith.extui %243 : vector<16x128xi1> to vector<16x128xi32>
    %245 = arith.sitofp %244 : vector<16x128xi32> to vector<16x128xf32>
    %cst_50 = arith.constant dense<0.000000e+00> : vector<16x768xf32>
    %246 = tpu.matmul %245, %1, %cst_50 {dimension_numbers = #tpu.dot_dimension_numbers<[1], [0], [0], [1], [0, 0, 1, 1], [], []>} : vector<16x128xf32>, vector<128x768xf32>, vector<16x768xf32> -> vector<16x768xf32>
    %247 = vector.extract_strided_slice %2 {offsets = [6, 0], sizes = [1, 768], strides = [1, 1]} : vector<8x768xf32> to vector<1x768xf32>
    %248 = vector.broadcast %247 : vector<1x768xf32> to vector<16x768xf32>
    %249 = arith.addf %246, %248 : vector<16x768xf32>
    %cst_51 = arith.constant dense<0.000000e+00> : vector<16xf32>
    %250 = vector.multi_reduction <add>, %249, %cst_51 [1] : vector<16x768xf32> to vector<16xf32>
    %251 = vector.shape_cast %250 : vector<16xf32> to vector<16x1xf32>
    %cst_52 = arith.constant 7.680000e+02 : f32
    %252 = vector.broadcast %cst_52 : f32 to vector<16x1xf32>
    %253 = arith.divf %251, %252 : vector<16x1xf32>
    %254 = vector.broadcast %253 : vector<16x1xf32> to vector<16x768xf32>
    %255 = arith.subf %249, %254 : vector<16x768xf32>
    %256 = arith.mulf %255, %255 : vector<16x768xf32>
    %cst_53 = arith.constant dense<0.000000e+00> : vector<16xf32>
    %257 = vector.multi_reduction <add>, %256, %cst_53 [1] : vector<16x768xf32> to vector<16xf32>
    %258 = vector.shape_cast %257 : vector<16xf32> to vector<16x1xf32>
    %cst_54 = arith.constant 7.680000e+02 : f32
    %259 = vector.broadcast %cst_54 : f32 to vector<16x1xf32>
    %260 = arith.divf %258, %259 : vector<16x1xf32>
    %261 = vector.broadcast %253 : vector<16x1xf32> to vector<16x768xf32>
    %262 = arith.subf %249, %261 : vector<16x768xf32>
    %cst_55 = arith.constant 9.99999996E-13 : f32
    %263 = vector.broadcast %cst_55 : f32 to vector<16x1xf32>
    %264 = arith.addf %260, %263 : vector<16x1xf32>
    %265 = math.rsqrt %264 : vector<16x1xf32>
    %266 = vector.broadcast %265 : vector<16x1xf32> to vector<16x768xf32>
    %267 = arith.mulf %262, %266 : vector<16x768xf32>
    %268 = vector.broadcast %3 : vector<1x768xf32> to vector<16x768xf32>
    %269 = arith.mulf %267, %268 : vector<16x768xf32>
    %270 = vector.broadcast %4 : vector<1x768xf32> to vector<16x768xf32>
    %271 = arith.addf %269, %270 : vector<16x768xf32>
    %c0_i32_56 = arith.constant 0 : i32
    %272 = vector.broadcast %c0_i32_56 : i32 to vector<16x1xi32>
    %273 = arith.cmpi sge, %240, %272 : vector<16x1xi32>
    %274 = arith.extui %273 : vector<16x1xi1> to vector<16x1xi32>
    %275 = arith.sitofp %274 : vector<16x1xi32> to vector<16x1xf32>
    %276 = vector.broadcast %275 : vector<16x1xf32> to vector<16x768xf32>
    %277 = arith.mulf %271, %276 : vector<16x768xf32>
    %278 = arith.addf %239, %277 : vector<16x768xf32>
    %279 = vector.extract_strided_slice %0 {offsets = [0, 7], sizes = [16, 1], strides = [1, 1]} : vector<16x8xi32> to vector<16x1xi32>
    %280 = tpu.iota {dimensions = array<i32: 1>} : vector<16x128xi32>
    %281 = vector.broadcast %279 : vector<16x1xi32> to vector<16x128xi32>
    %282 = arith.cmpi eq, %281, %280 : vector<16x128xi32>
    %283 = arith.extui %282 : vector<16x128xi1> to vector<16x128xi32>
    %284 = arith.sitofp %283 : vector<16x128xi32> to vector<16x128xf32>
    %cst_57 = arith.constant dense<0.000000e+00> : vector<16x768xf32>
    %285 = tpu.matmul %284, %1, %cst_57 {dimension_numbers = #tpu.dot_dimension_numbers<[1], [0], [0], [1], [0, 0, 1, 1], [], []>} : vector<16x128xf32>, vector<128x768xf32>, vector<16x768xf32> -> vector<16x768xf32>
    %286 = vector.extract_strided_slice %2 {offsets = [7, 0], sizes = [1, 768], strides = [1, 1]} : vector<8x768xf32> to vector<1x768xf32>
    %287 = vector.broadcast %286 : vector<1x768xf32> to vector<16x768xf32>
    %288 = arith.addf %285, %287 : vector<16x768xf32>
    %cst_58 = arith.constant dense<0.000000e+00> : vector<16xf32>
    %289 = vector.multi_reduction <add>, %288, %cst_58 [1] : vector<16x768xf32> to vector<16xf32>
    %290 = vector.shape_cast %289 : vector<16xf32> to vector<16x1xf32>
    %cst_59 = arith.constant 7.680000e+02 : f32
    %291 = vector.broadcast %cst_59 : f32 to vector<16x1xf32>
    %292 = arith.divf %290, %291 : vector<16x1xf32>
    %293 = vector.broadcast %292 : vector<16x1xf32> to vector<16x768xf32>
    %294 = arith.subf %288, %293 : vector<16x768xf32>
    %295 = arith.mulf %294, %294 : vector<16x768xf32>
    %cst_60 = arith.constant dense<0.000000e+00> : vector<16xf32>
    %296 = vector.multi_reduction <add>, %295, %cst_60 [1] : vector<16x768xf32> to vector<16xf32>
    %297 = vector.shape_cast %296 : vector<16xf32> to vector<16x1xf32>
    %cst_61 = arith.constant 7.680000e+02 : f32
    %298 = vector.broadcast %cst_61 : f32 to vector<16x1xf32>
    %299 = arith.divf %297, %298 : vector<16x1xf32>
    %300 = vector.broadcast %292 : vector<16x1xf32> to vector<16x768xf32>
    %301 = arith.subf %288, %300 : vector<16x768xf32>
    %cst_62 = arith.constant 9.99999996E-13 : f32
    %302 = vector.broadcast %cst_62 : f32 to vector<16x1xf32>
    %303 = arith.addf %299, %302 : vector<16x1xf32>
    %304 = math.rsqrt %303 : vector<16x1xf32>
    %305 = vector.broadcast %304 : vector<16x1xf32> to vector<16x768xf32>
    %306 = arith.mulf %301, %305 : vector<16x768xf32>
    %307 = vector.broadcast %3 : vector<1x768xf32> to vector<16x768xf32>
    %308 = arith.mulf %306, %307 : vector<16x768xf32>
    %309 = vector.broadcast %4 : vector<1x768xf32> to vector<16x768xf32>
    %310 = arith.addf %308, %309 : vector<16x768xf32>
    %c0_i32_63 = arith.constant 0 : i32
    %311 = vector.broadcast %c0_i32_63 : i32 to vector<16x1xi32>
    %312 = arith.cmpi sge, %279, %311 : vector<16x1xi32>
    %313 = arith.extui %312 : vector<16x1xi1> to vector<16x1xi32>
    %314 = arith.sitofp %313 : vector<16x1xi32> to vector<16x1xf32>
    %315 = vector.broadcast %314 : vector<16x1xf32> to vector<16x768xf32>
    %316 = arith.mulf %310, %315 : vector<16x768xf32>
    %317 = arith.addf %278, %316 : vector<16x768xf32>
    %318 = arith.truncf %317 : vector<16x768xf32> to vector<16x768xbf16>
    %c0_64 = arith.constant 0 : index
    %c0_65 = arith.constant 0 : index
    %319 = vector.load %arg6[%c0_64, %c0_65] : memref<16x768xbf16, #tpu.memory_space<vmem>>, vector<16x768xbf16>
    tpu.vector_store %arg6[%c0_64, %c0_65], %318 {strides = array<i32>} : memref<16x768xbf16, #tpu.memory_space<vmem>>, vector<16x768xbf16>,
    return
  }
  func.func @transform_0(%arg0: i32) -> (i32, i32) {
    %c0_i32 = arith.constant 0 : i32
    %c0_i32_0 = arith.constant 0 : i32
    return %arg0, %c0_i32 : i32, i32
  }
  func.func @transform_1(%arg0: i32) -> (i32, i32) {
    %c0_i32 = arith.constant 0 : i32
    %c0_i32_0 = arith.constant 0 : i32
    %c0_i32_1 = arith.constant 0 : i32
    return %c0_i32, %c0_i32_0 : i32, i32
  }
  func.func @transform_2(%arg0: i32) -> (i32, i32) {
    %c0_i32 = arith.constant 0 : i32
    %c0_i32_0 = arith.constant 0 : i32
    %c0_i32_1 = arith.constant 0 : i32
    return %c0_i32, %c0_i32_0 : i32, i32
  }
  func.func @transform_3(%arg0: i32) -> (i32, i32) {
    %c0_i32 = arith.constant 0 : i32
    %c0_i32_0 = arith.constant 0 : i32
    %c0_i32_1 = arith.constant 0 : i32
    return %c0_i32, %c0_i32_0 : i32, i32
  }
  func.func @transform_4(%arg0: i32) -> (i32, i32) {
    %c0_i32 = arith.constant 0 : i32
    %c0_i32_0 = arith.constant 0 : i32
    %c0_i32_1 = arith.constant 0 : i32
    return %c0_i32, %c0_i32_0 : i32, i32
  }
  func.func @transform_5(%arg0: i32) -> (i32, i32) {
    %c0_i32 = arith.constant 0 : i32
    %c0_i32_0 = arith.constant 0 : i32
    return %arg0, %c0_i32 : i32, i32
  }
}

</mosaic_0001>

<llo_original>
// kernel: tpu_custom_call.1
$region0: #{tpu_custom_call.1}
  #allocation0 [shape = 'u32[]', space=smem, size = 0x4, offset = 0x4, fixed_abs, tag = 'smem constant byte address 0x4 - core index']
  #allocation1 [shape = 'u32[72,128]{1,0:T(1,128)}', space=vmem, size = 0x9000, scoped, tag = 'internal scratch']
  %s0 = inlined_call_operand.vmem [shape: s32[16,8], index: 0, kind: input, shape index: {}]
  %s1 = inlined_call_operand.hbm [shape: f32[128,768], index: 1, kind: input, shape index: {}]
  %s2 = inlined_call_operand.hbm [shape: f32[8,768], index: 2, kind: input, shape index: {}]
  %s3 = inlined_call_operand.vmem [shape: f32[1,768], index: 3, kind: input, shape index: {}]
  %s4 = inlined_call_operand.vmem [shape: f32[1,768], index: 4, kind: input, shape index: {}]
  %s5 = inlined_call_operand.hbm [shape: bf16[16,768], index: 5, kind: output, shape index: {}]
  %s6 = sld [smem:[#allocation0]]
  $region38: #{tpu_custom_call.1} parent=0
    _
  %s8 = ssub.s32 1, %s6
  %s9 = scalar_select 0, %s8, %s6
  $region1: #{tpu_custom_call.1} parent=0
    #allocation2 [shape = 'u8[393216]{0}', space=vmem, size = 0x60000, scoped, tag = 'input window, operand 1, single buffered']
    #allocation3 [shape = 's32[1]{0}', space=sflag, size = 0x4, scoped, tag = 'scoped memory for tpu_custom_call.1']
    #allocation4 [shape = 's32[1]{0}', space=sflag, size = 0x4, scoped, tag = 'scoped memory for tpu_custom_call.1']
    #allocation5 [shape = 'u8[24576]{0}', space=vmem, size = 0x6000, scoped, tag = 'input window, operand 2, single buffered']
    #allocation6 [shape = 's32[1]{0}', space=sflag, size = 0x4, scoped, tag = 'scoped memory for tpu_custom_call.1']
    #allocation7 [shape = 'u8[24576]{0}', space=vmem, size = 0x6000, scoped, tag = 'output window, operand 0, single buffered']
    %10 = vsyncpa [#allocation3], 0
    %11 = vsyncpa [#allocation6], 0
    %12 = vsyncpa [#allocation4], 0
    // Predicated region
    $region2: #{tpu_custom_call.1} parent=1 // pred_check
      _
    $region3: #{tpu_custom_call.1} parent=1 // pred_check_branch
      %14 = sbr.rel (0) target = $region5
    $region4: #{tpu_custom_call.1} parent=1 // pred_region
      _
    $region5: #{tpu_custom_call.1} parent=1 // pred_fallthru
      _
    // Predicated region
    $region6: #{tpu_custom_call.1} parent=1 // pred_check
      _
    $region7: #{tpu_custom_call.1} parent=1 // pred_check_branch
      %16 = sbr.rel (0) target = $region9
    $region8: #{tpu_custom_call.1} parent=1 // pred_region
      %18 = vsyncadd [#allocation3], 0
      %s19 = sshll.u32 %s1, 4
      %s20 = int_to_ptr.hbm [resolvable:$true] %s19
      %s21 = sshll.u32 [#allocation2], 4
      %s22 = int_to_ptr.vmem [resolvable:$true] %s21
      %27 = dma.hbm_to_vmem [thread:$0]  %s20, 12288, %s22, [#allocation3], 768, 768, 48
    $region9: #{tpu_custom_call.1} parent=1 // pred_fallthru
      _
    // Predicated region
    $region10: #{tpu_custom_call.1} parent=1 // pred_check
      _
    $region11: #{tpu_custom_call.1} parent=1 // pred_check_branch
      %29 = sbr.rel (0) target = $region13
    $region12: #{tpu_custom_call.1} parent=1 // pred_region
      %31 = vsyncadd [#allocation6], 0
      %s33 = sshll.u32 %s2, 4
      %s34 = int_to_ptr.hbm [resolvable:$true] %s33
      %s35 = sshll.u32 [#allocation5], 4
      %s36 = int_to_ptr.vmem [resolvable:$true] %s35
      %38 = dma.hbm_to_vmem [thread:$0]  %s34, 768, %s36, [#allocation6]
    $region13: #{tpu_custom_call.1} parent=1 // pred_fallthru
      _
    // Predicated region
    $region14: #{tpu_custom_call.1} parent=1 // pred_check
      _
    $region15: #{tpu_custom_call.1} parent=1 // pred_check_branch
      %40 = sbr.rel (0) target = $region17
    $region16: #{tpu_custom_call.1} parent=1 // pred_region
      _
    $region17: #{tpu_custom_call.1} parent=1 // pred_fallthru
      _
    // Predicated region
    $region18: #{tpu_custom_call.1} parent=1 // pred_check
      _
    $region19: #{tpu_custom_call.1} parent=1 // pred_check_branch
      %42 = sbr.rel (0) target = $region21
    $region20: #{tpu_custom_call.1} parent=1 // pred_region
      _
    $region21: #{tpu_custom_call.1} parent=1 // pred_fallthru
      _
    // Predicated region
    $region22: #{tpu_custom_call.1} parent=1 // pred_check
      _
    $region23: #{tpu_custom_call.1} parent=1 // pred_check_branch
      %44 = sbr.rel (0) target = $region25
    $region24: #{tpu_custom_call.1} parent=1 // pred_region
      %46 = dma.done [#allocation3], 12288
    $region25: #{tpu_custom_call.1} parent=1 // pred_fallthru
      _
    // Predicated region
    $region26: #{tpu_custom_call.1} parent=1 // pred_check
      _
    $region27: #{tpu_custom_call.1} parent=1 // pred_check_branch
      %48 = sbr.rel (0) target = $region29
    $region28: #{tpu_custom_call.1} parent=1 // pred_region
      %50 = dma.done [#allocation6], 768
    $region29: #{tpu_custom_call.1} parent=1 // pred_fallthru
      _
    %v51 = vld [vmem:[%s0] sm:$0xff]
    %v52 = vld [vmem:[%s0 + $0x8] sm:$0xff]
    %v53 = vld [vmem:[#allocation2] sm:$0xff]
    %v54 = vld [vmem:[#allocation2 + $0x8] sm:$0xff]
    %v55 = vld [vmem:[#allocation2 + $0x10] sm:$0xff]
    %v56 = vld [vmem:[#allocation2 + $0x18] sm:$0xff]
    %v57 = vld [vmem:[#allocation2 + $0x20] sm:$0xff]
    %v58 = vld [vmem:[#allocation2 + $0x28] sm:$0xff]
    %v59 = vld [vmem:[#allocation2 + $0x30] sm:$0xff]
    %v60 = vld [vmem:[#allocation2 + $0x38] sm:$0xff]
    %v61 = vld [vmem:[#allocation2 + $0x40] sm:$0xff]
    %v62 = vld [vmem:[#allocation2 + $0x48] sm:$0xff]
    %v63 = vld [vmem:[#allocation2 + $0x50] sm:$0xff]
    %v64 = vld [vmem:[#allocation2 + $0x58] sm:$0xff]
    %v65 = vld [vmem:[#allocation2 + $0x60] sm:$0xff]
    %v66 = vld [vmem:[#allocation2 + $0x68] sm:$0xff]
    %v67 = vld [vmem:[#allocation2 + $0x70] sm:$0xff]
    %v68 = vld [vmem:[#allocation2 + $0x78] sm:$0xff]
    %v69 = vld [vmem:[#allocation2 + $0x80] sm:$0xff]
    %v70 = vld [vmem:[#allocation2 + $0x88] sm:$0xff]
    %v71 = vld [vmem:[#allocation2 + $0x90] sm:$0xff]
    %v72 = vld [vmem:[#allocation2 + $0x98] sm:$0xff]
    %v73 = vld [vmem:[#allocation2 + $0xa0] sm:$0xff]
    %v74 = vld [vmem:[#allocation2 + $0xa8] sm:$0xff]
    %v75 = vld [vmem:[#allocation2 + $0xb0] sm:$0xff]
    %v76 = vld [vmem:[#allocation2 + $0xb8] sm:$0xff]
    %v77 = vld [vmem:[#allocation2 + $0xc0] sm:$0xff]
    %v78 = vld [vmem:[#allocation2 + $0xc8] sm:$0xff]
    %v79 = vld [vmem:[#allocation2 + $0xd0] sm:$0xff]
    %v80 = vld [vmem:[#allocation2 + $0xd8] sm:$0xff]
    %v81 = vld [vmem:[#allocation2 + $0xe0] sm:$0xff]
    %v82 = vld [vmem:[#allocation2 + $0xe8] sm:$0xff]
    %v83 = vld [vmem:[#allocation2 + $0xf0] sm:$0xff]
    %v84 = vld [vmem:[#allocation2 + $0xf8] sm:$0xff]
    %v85 = vld [vmem:[#allocation2 + $0x100] sm:$0xff]
    %v86 = vld [vmem:[#allocation2 + $0x108] sm:$0xff]
    %v87 = vld [vmem:[#allocation2 + $0x110] sm:$0xff]
    %v88 = vld [vmem:[#allocation2 + $0x118] sm:$0xff]
    %v89 = vld [vmem:[#allocation2 + $0x120] sm:$0xff]
    %v90 = vld [vmem:[#allocation2 + $0x128] sm:$0xff]
    %v91 = vld [vmem:[#allocation2 + $0x130] sm:$0xff]
    %v92 = vld [vmem:[#allocation2 + $0x138] sm:$0xff]
    %v93 = vld [vmem:[#allocation2 + $0x140] sm:$0xff]
    %v94 = vld [vmem:[#allocation2 + $0x148] sm:$0xff]
    %v95 = vld [vmem:[#allocation2 + $0x150] sm:$0xff]
    %v96 = vld [vmem:[#allocation2 + $0x158] sm:$0xff]
    %v97 = vld [vmem:[#allocation2 + $0x160] sm:$0xff]
    %v98 = vld [vmem:[#allocation2 + $0x168] sm:$0xff]
    %v99 = vld [vmem:[#allocation2 + $0x170] sm:$0xff]
    %v100 = vld [vmem:[#allocation2 + $0x178] sm:$0xff]
    %v101 = vld [vmem:[#allocation2 + $0x180] sm:$0xff]
    %v102 = vld [vmem:[#allocation2 + $0x188] sm:$0xff]
    %v103 = vld [vmem:[#allocation2 + $0x190] sm:$0xff]
    %v104 = vld [vmem:[#allocation2 + $0x198] sm:$0xff]
    %v105 = vld [vmem:[#allocation2 + $0x1a0] sm:$0xff]
    %v106 = vld [vmem:[#allocation2 + $0x1a8] sm:$0xff]
    %v107 = vld [vmem:[#allocation2 + $0x1b0] sm:$0xff]
    %v108 = vld [vmem:[#allocation2 + $0x1b8] sm:$0xff]
    %v109 = vld [vmem:[#allocation2 + $0x1c0] sm:$0xff]
    %v110 = vld [vmem:[#allocation2 + $0x1c8] sm:$0xff]
    %v111 = vld [vmem:[#allocation2 + $0x1d0] sm:$0xff]
    %v112 = vld [vmem:[#allocation2 + $0x1d8] sm:$0xff]
    %v113 = vld [vmem:[#allocation2 + $0x1e0] sm:$0xff]
    %v114 = vld [vmem:[#allocation2 + $0x1e8] sm:$0xff]
    %v115 = vld [vmem:[#allocation2 + $0x1f0] sm:$0xff]
    %v116 = vld [vmem:[#allocation2 + $0x1f8] sm:$0xff]
    %v117 = vld [vmem:[#allocation2 + $0x200] sm:$0xff]
    %v118 = vld [vmem:[#allocation2 + $0x208] sm:$0xff]
    %v119 = vld [vmem:[#allocation2 + $0x210] sm:$0xff]
    %v120 = vld [vmem:[#allocation2 + $0x218] sm:$0xff]
    %v121 = vld [vmem:[#allocation2 + $0x220] sm:$0xff]
    %v122 = vld [vmem:[#allocation2 + $0x228] sm:$0xff]
    %v123 = vld [vmem:[#allocation2 + $0x230] sm:$0xff]
    %v124 = vld [vmem:[#allocation2 + $0x238] sm:$0xff]
    %v125 = vld [vmem:[#allocation2 + $0x240] sm:$0xff]
    %v126 = vld [vmem:[#allocation2 + $0x248] sm:$0xff]
    %v127 = vld [vmem:[#allocation2 + $0x250] sm:$0xff]
    %v128 = vld [vmem:[#allocation2 + $0x258] sm:$0xff]
    %v129 = vld [vmem:[#allocation2 + $0x260] sm:$0xff]
    %v130 = vld [vmem:[#allocation2 + $0x268] sm:$0xff]
    %v131 = vld [vmem:[#allocation2 + $0x270] sm:$0xff]
    %v132 = vld [vmem:[#allocation2 + $0x278] sm:$0xff]
    %v133 = vld [vmem:[#allocation2 + $0x280] sm:$0xff]
    %v134 = vld [vmem:[#allocation2 + $0x288] sm:$0xff]
    %v135 = vld [vmem:[#allocation2 + $0x290] sm:$0xff]
    %v136 = vld [vmem:[#allocation2 + $0x298] sm:$0xff]
    %v137 = vld [vmem:[#allocation2 + $0x2a0] sm:$0xff]
    %v138 = vld [vmem:[#allocation2 + $0x2a8] sm:$0xff]
    %v139 = vld [vmem:[#allocation2 + $0x2b0] sm:$0xff]
    %v140 = vld [vmem:[#allocation2 + $0x2b8] sm:$0xff]
    %v141 = vld [vmem:[#allocation2 + $0x2c0] sm:$0xff]
    %v142 = vld [vmem:[#allocation2 + $0x2c8] sm:$0xff]
    %v143 = vld [vmem:[#allocation2 + $0x2d0] sm:$0xff]
    %v144 = vld [vmem:[#allocation2 + $0x2d8] sm:$0xff]
    %v145 = vld [vmem:[#allocation2 + $0x2e0] sm:$0xff]
    %v146 = vld [vmem:[#allocation2 + $0x2e8] sm:$0xff]
    %v147 = vld [vmem:[#allocation2 + $0x2f0] sm:$0xff]
    %v148 = vld [vmem:[#allocation2 + $0x2f8] sm:$0xff]
    %v149 = vld [vmem:[#allocation5] sm:$0xff]
    %v150 = vld [vmem:[#allocation5 + $0x8] sm:$0xff]
    %v151 = vld [vmem:[#allocation5 + $0x10] sm:$0xff]
    %v152 = vld [vmem:[#allocation5 + $0x18] sm:$0xff]
    %v153 = vld [vmem:[#allocation5 + $0x20] sm:$0xff]
    %v154 = vld [vmem:[#allocation5 + $0x28] sm:$0xff]
    %v155 = vld [vmem:[%s3] sm:$0x3f]
    %v156 = vld [vmem:[%s4] sm:$0x3f]
    %v157 = vlaneseq
    %v158 = vand.u32 %v157, 127
    %159 = vset.pattern.permute.xlu0 0
    %160 = vperm.xlu0 %159, %v51
    %v161 = vpop.permute.xlu0 %160
    %162 = vset.pattern.permute.xlu0 0
    %163 = vperm.xlu0 %162, %v52
    %v164 = vpop.permute.xlu0 %163
    %vm165 = vcmp.eq.s32.totalorder %v161, %v158
    %vm166 = vcmp.eq.s32.totalorder %v164, %v158
    %v167 = vsel %vm165, 1, 0
    %v168 = vsel %vm166, 1, 0
    %v169 = vcvt.s32.f32 %v167
    %v170 = vcvt.s32.f32 %v168
    %v171 = vperm.slane %v149, 0
    %v172 = vperm.slane %v150, 0
    %v173 = vperm.slane %v151, 0
    %v174 = vperm.slane %v152, 0
    %v175 = vperm.slane %v153, 0
    %v176 = vperm.slane %v154, 0
    %177 = vmatpush.msra.mxu0 %v143
    %178 = vmatpush.msra.mxu0 %v137
    %179 = vmatpush.msra.mxu0 %v131
    %180 = vmatpush.msra.mxu0 %v125
    %181 = vmatpush.msra.mxu0 %v119
    %182 = vmatpush.msra.mxu0 %v113
    %183 = vmatpush.msra.mxu0 %v107
    %184 = vmatpush.msra.mxu0 %v101
    %185 = vmatpush.msra.mxu0 %v95
    %186 = vmatpush.msra.mxu0 %v89
    %187 = vmatpush.msra.mxu0 %v83
    %188 = vmatpush.msra.mxu0 %v77
    %189 = vmatpush.msra.mxu0 %v71
    %190 = vmatpush.msra.mxu0 %v65
    %191 = vmatpush.msra.mxu0 %v59
    %192 = vmatpush.msra.mxu0 %v53
    %193 = vmatmul.f32.gmra.mxu0 %v169
    %v194 = vpop.f32.mrf.mxu0
    %v195 = vadd.f32 %v171, %v194
    %196 = vmatmul.f32.gmra.mxu0 %v170
    %v197 = vpop.f32.mrf.mxu0
    %v198 = vadd.f32 %v171, %v197
    %199 = vdwg.mxu0
    %200 = vmatpush.msra.mxu0 %v144
    %201 = vmatpush.msra.mxu0 %v138
    %202 = vmatpush.msra.mxu0 %v132
    %203 = vmatpush.msra.mxu0 %v126
    %204 = vmatpush.msra.mxu0 %v120
    %205 = vmatpush.msra.mxu0 %v114
    %206 = vmatpush.msra.mxu0 %v108
    %207 = vmatpush.msra.mxu0 %v102
    %208 = vmatpush.msra.mxu0 %v96
    %209 = vmatpush.msra.mxu0 %v90
    %210 = vmatpush.msra.mxu0 %v84
    %211 = vmatpush.msra.mxu0 %v78
    %212 = vmatpush.msra.mxu0 %v72
    %213 = vmatpush.msra.mxu0 %v66
    %214 = vmatpush.msra.mxu0 %v60
    %215 = vmatpush.msra.mxu0 %v54
    %216 = vmatmul.f32.gmra.mxu0 %v169
    %v217 = vpop.f32.mrf.mxu0
    %v218 = vadd.f32 %v172, %v217
    %219 = vmatmul.f32.gmra.mxu0 %v170
    %v220 = vpop.f32.mrf.mxu0
    %v221 = vadd.f32 %v172, %v220
    %222 = vdwg.mxu0
    %223 = vmatpush.msra.mxu0 %v145
    %224 = vmatpush.msra.mxu0 %v139
    %225 = vmatpush.msra.mxu0 %v133
    %226 = vmatpush.msra.mxu0 %v127
    %227 = vmatpush.msra.mxu0 %v121
    %228 = vmatpush.msra.mxu0 %v115
    %229 = vmatpush.msra.mxu0 %v109
    %230 = vmatpush.msra.mxu0 %v103
    %231 = vmatpush.msra.mxu0 %v97
    %232 = vmatpush.msra.mxu0 %v91
    %233 = vmatpush.msra.mxu0 %v85
    %234 = vmatpush.msra.mxu0 %v79
    %235 = vmatpush.msra.mxu0 %v73
    %236 = vmatpush.msra.mxu0 %v67
    %237 = vmatpush.msra.mxu0 %v61
    %238 = vmatpush.msra.mxu0 %v55
    %239 = vmatmul.f32.gmra.mxu0 %v169
    %v240 = vpop.f32.mrf.mxu0
    %v241 = vadd.f32 %v173, %v240
    %242 = vmatmul.f32.gmra.mxu0 %v170
    %v243 = vpop.f32.mrf.mxu0
    %v244 = vadd.f32 %v173, %v243
    %245 = vdwg.mxu0
    %246 = vmatpush.msra.mxu0 %v146
    %247 = vmatpush.msra.mxu0 %v140
    %248 = vmatpush.msra.mxu0 %v134
    %249 = vmatpush.msra.mxu0 %v128
    %250 = vmatpush.msra.mxu0 %v122
    %251 = vmatpush.msra.mxu0 %v116
    %252 = vmatpush.msra.mxu0 %v110
    %253 = vmatpush.msra.mxu0 %v104
    %254 = vmatpush.msra.mxu0 %v98
    %255 = vmatpush.msra.mxu0 %v92
    %256 = vmatpush.msra.mxu0 %v86
    %257 = vmatpush.msra.mxu0 %v80
    %258 = vmatpush.msra.mxu0 %v74
    %259 = vmatpush.msra.mxu0 %v68
    %260 = vmatpush.msra.mxu0 %v62
    %261 = vmatpush.msra.mxu0 %v56
    %262 = vmatmul.f32.gmra.mxu0 %v169
    %v263 = vpop.f32.mrf.mxu0
    %v264 = vadd.f32 %v174, %v263
    %265 = vmatmul.f32.gmra.mxu0 %v170
    %v266 = vpop.f32.mrf.mxu0
    %v267 = vadd.f32 %v174, %v266
    %268 = vdwg.mxu0
    %269 = vmatpush.msra.mxu0 %v147
    %270 = vmatpush.msra.mxu0 %v141
    %271 = vmatpush.msra.mxu0 %v135
    %272 = vmatpush.msra.mxu0 %v129
    %273 = vmatpush.msra.mxu0 %v123
    %274 = vmatpush.msra.mxu0 %v117
    %275 = vmatpush.msra.mxu0 %v111
    %276 = vmatpush.msra.mxu0 %v105
    %277 = vmatpush.msra.mxu0 %v99
    %278 = vmatpush.msra.mxu0 %v93
    %279 = vmatpush.msra.mxu0 %v87
    %280 = vmatpush.msra.mxu0 %v81
    %281 = vmatpush.msra.mxu0 %v75
    %282 = vmatpush.msra.mxu0 %v69
    %283 = vmatpush.msra.mxu0 %v63
    %284 = vmatpush.msra.mxu0 %v57
    %285 = vmatmul.f32.gmra.mxu0 %v169
    %v286 = vpop.f32.mrf.mxu0
    %v287 = vadd.f32 %v175, %v286
    %288 = vmatmul.f32.gmra.mxu0 %v170
    %v289 = vpop.f32.mrf.mxu0
    %v290 = vadd.f32 %v175, %v289
    %291 = vdwg.mxu0
    %292 = vmatpush.msra.mxu0 %v148
    %293 = vmatpush.msra.mxu0 %v142
    %294 = vmatpush.msra.mxu0 %v136
    %295 = vmatpush.msra.mxu0 %v130
    %296 = vmatpush.msra.mxu0 %v124
    %297 = vmatpush.msra.mxu0 %v118
    %298 = vmatpush.msra.mxu0 %v112
    %299 = vmatpush.msra.mxu0 %v106
    %300 = vmatpush.msra.mxu0 %v100
    %301 = vmatpush.msra.mxu0 %v94
    %302 = vmatpush.msra.mxu0 %v88
    %303 = vmatpush.msra.mxu0 %v82
    %304 = vmatpush.msra.mxu0 %v76
    %305 = vmatpush.msra.mxu0 %v70
    %306 = vmatpush.msra.mxu0 %v64
    %307 = vmatpush.msra.mxu0 %v58
    %308 = vmatmul.f32.gmra.mxu0 %v169
    %v309 = vpop.f32.mrf.mxu0
    %v310 = vadd.f32 %v176, %v309
    %311 = vmatmul.f32.gmra.mxu0 %v170
    %v312 = vpop.f32.mrf.mxu0
    %v313 = vadd.f32 %v176, %v312
    %314 = vdwg.mxu0
    %v315 = vadd.f32 %v195, %v218
    %v316 = vadd.f32 %v315, %v241
    %v317 = vadd.f32 %v316, %v264
    %v318 = vadd.f32 %v317, %v287
    %v319 = vadd.f32 %v318, %v310
    %320 = vadd.xlane.f32.xlu0 %v319
    %v321 = vpop.xlane.xlu0 %320
    %v322 = vadd.f32 %v198, %v221
    %v323 = vadd.f32 %v322, %v244
    %v324 = vadd.f32 %v323, %v267
    %v325 = vadd.f32 %v324, %v290
    %v326 = vadd.f32 %v325, %v313
    %327 = vadd.xlane.f32.xlu0 %v326
    %v328 = vpop.xlane.xlu0 %327
    %v329 = vrcp.pop 768.0
    %v330 = vmul.f32 768.0, %v329
    %v331 = vsub.f32 1.0, %v330
    %v332 = vmul.f32 %v329, %v331
    %v333 = vadd.f32 %v329, %v332
    %vm334 = vweird.f32 %v329
    %v335 = vsel %vm334, %v329, %v333
    %v336 = vmul.f32 %v321, %v335
    %v337 = vmul.f32 %v328, %v335
    %v338 = vsub.f32 %v195, %v336
    %v339 = vsub.f32 %v218, %v336
    %v340 = vsub.f32 %v241, %v336
    %v341 = vsub.f32 %v264, %v336
    %v342 = vsub.f32 %v287, %v336
    %v343 = vsub.f32 %v310, %v336
    %v344 = vsub.f32 %v198, %v337
    %v345 = vsub.f32 %v221, %v337
    %v346 = vsub.f32 %v244, %v337
    %v347 = vsub.f32 %v267, %v337
    %v348 = vsub.f32 %v290, %v337
    %v349 = vsub.f32 %v313, %v337
    %v350 = vmul.f32 %v338, %v338
    %v351 = vmul.f32 %v339, %v339
    %v352 = vmul.f32 %v340, %v340
    %v353 = vmul.f32 %v341, %v341
    %v354 = vmul.f32 %v342, %v342
    %v355 = vmul.f32 %v343, %v343
    %v356 = vmul.f32 %v344, %v344
    %v357 = vmul.f32 %v345, %v345
    %v358 = vmul.f32 %v346, %v346
    %v359 = vmul.f32 %v347, %v347
    %v360 = vmul.f32 %v348, %v348
    %v361 = vmul.f32 %v349, %v349
    %v362 = vadd.f32 %v350, %v351
    %v363 = vadd.f32 %v362, %v352
    %v364 = vadd.f32 %v363, %v353
    %v365 = vadd.f32 %v364, %v354
    %v366 = vadd.f32 %v365, %v355
    %367 = vadd.xlane.f32.xlu0 %v366
    %v368 = vpop.xlane.xlu0 %367
    %v369 = vadd.f32 %v356, %v357
    %v370 = vadd.f32 %v369, %v358
    %v371 = vadd.f32 %v370, %v359
    %v372 = vadd.f32 %v371, %v360
    %v373 = vadd.f32 %v372, %v361
    %374 = vadd.xlane.f32.xlu0 %v373
    %v375 = vpop.xlane.xlu0 %374
    %v376 = vmul.f32 %v368, %v335
    %v377 = vmul.f32 %v375, %v335
    %v378 = vadd.f32 %v376, 1e-12
    %v379 = vadd.f32 %v377, 1e-12
    %v380 = vrsqrt.pop %v378
    %v381 = vmul.f32 %v380, %v378
    %v382 = vmul.f32 %v381, %v380
    %v383 = vmul.f32 0.5, %v382
    %v384 = vsub.f32 1.5, %v383
    %v385 = vmul.f32 %v380, %v384
    %vm386 = vweird.f32 %v378
    %vm387 = vweird.f32 %v380
    %vm388 = vmor %vm386, %vm387
    %v389 = vsel %vm388, %v380, %v385
    %v390 = vrsqrt.pop %v379
    %v391 = vmul.f32 %v390, %v379
    %v392 = vmul.f32 %v391, %v390
    %v393 = vmul.f32 0.5, %v392
    %v394 = vsub.f32 1.5, %v393
    %v395 = vmul.f32 %v390, %v394
    %vm396 = vweird.f32 %v379
    %vm397 = vweird.f32 %v390
    %vm398 = vmor %vm396, %vm397
    %v399 = vsel %vm398, %v390, %v395
    %v400 = vmul.f32 %v338, %v389
    %v401 = vmul.f32 %v339, %v389
    %v402 = vmul.f32 %v340, %v389
    %v403 = vmul.f32 %v341, %v389
    %v404 = vmul.f32 %v342, %v389
    %v405 = vmul.f32 %v343, %v389
    %v406 = vmul.f32 %v344, %v399
    %v407 = vmul.f32 %v345, %v399
    %v408 = vmul.f32 %v346, %v399
    %v409 = vmul.f32 %v347, %v399
    %v410 = vmul.f32 %v348, %v399
    %v411 = vmul.f32 %v349, %v399
    %v413 = vperm.slane %v155, 0
    %v414 = vperm.slane %v155, 1
    %v415 = vperm.slane %v155, 2
    %v416 = vperm.slane %v155, 3
    %v417 = vperm.slane %v155, 4
    %v418 = vperm.slane %v155, 5
    %v425 = vmul.f32 %v400, %v413
    %v426 = vmul.f32 %v401, %v414
    %v427 = vmul.f32 %v402, %v415
    %v428 = vmul.f32 %v403, %v416
    %v429 = vmul.f32 %v404, %v417
    %v430 = vmul.f32 %v405, %v418
    %v431 = vmul.f32 %v406, %v413
    %v432 = vmul.f32 %v407, %v414
    %v433 = vmul.f32 %v408, %v415
    %v434 = vmul.f32 %v409, %v416
    %v435 = vmul.f32 %v410, %v417
    %v436 = vmul.f32 %v411, %v418
    %v438 = vperm.slane %v156, 0
    %v439 = vperm.slane %v156, 1
    %v440 = vperm.slane %v156, 2
    %v441 = vperm.slane %v156, 3
    %v442 = vperm.slane %v156, 4
    %v443 = vperm.slane %v156, 5
    %v450 = vadd.f32 %v425, %v438
    %v451 = vadd.f32 %v426, %v439
    %v452 = vadd.f32 %v427, %v440
    %v453 = vadd.f32 %v428, %v441
    %v454 = vadd.f32 %v429, %v442
    %v455 = vadd.f32 %v430, %v443
    %v456 = vadd.f32 %v431, %v438
    %v457 = vadd.f32 %v432, %v439
    %v458 = vadd.f32 %v433, %v440
    %v459 = vadd.f32 %v434, %v441
    %v460 = vadd.f32 %v435, %v442
    %v461 = vadd.f32 %v436, %v443
    %vm462 = vcmp.ge.s32.totalorder %v51, 0
    %vm463 = vcmp.ge.s32.totalorder %v52, 0
    %v464 = vsel %vm462, 1, 0
    %v465 = vsel %vm463, 1, 0
    %v466 = vcvt.s32.f32 %v464
    %v467 = vcvt.s32.f32 %v465
    %469 = vset.pattern.permute.xlu0 0
    %470 = vperm.xlu0 %469, %v466
    %v471 = vpop.permute.xlu0 %470
    %474 = vset.pattern.permute.xlu0 0
    %475 = vperm.xlu0 %474, %v467
    %v476 = vpop.permute.xlu0 %475
    %v478 = vmul.f32 %v450, %v471
    %v479 = vmul.f32 %v451, %v471
    %v480 = vmul.f32 %v452, %v471
    %v481 = vmul.f32 %v453, %v471
    %v482 = vmul.f32 %v454, %v471
    %v483 = vmul.f32 %v455, %v471
    %v484 = vmul.f32 %v456, %v476
    %v485 = vmul.f32 %v457, %v476
    %v486 = vmul.f32 %v458, %v476
    %v487 = vmul.f32 %v459, %v476
    %v488 = vmul.f32 %v460, %v476
    %v489 = vmul.f32 %v461, %v476
    %v490 = vadd.f32 %v478, 0.0
    %v491 = vadd.f32 %v479, 0.0
    %v492 = vadd.f32 %v480, 0.0
    %v493 = vadd.f32 %v481, 0.0
    %v494 = vadd.f32 %v482, 0.0
    %v495 = vadd.f32 %v483, 0.0
    %v496 = vadd.f32 %v484, 0.0
    %v497 = vadd.f32 %v485, 0.0
    %v498 = vadd.f32 %v486, 0.0
    %v499 = vadd.f32 %v487, 0.0
    %v500 = vadd.f32 %v488, 0.0
    %v501 = vadd.f32 %v489, 0.0
    %502 = vset.pattern.permute.xlu0 1
    %503 = vperm.xlu0 %502, %v51
    %v504 = vpop.permute.xlu0 %503
    %505 = vset.pattern.permute.xlu0 1
    %506 = vperm.xlu0 %505, %v52
    %v507 = vpop.permute.xlu0 %506
    %vm508 = vcmp.eq.s32.totalorder %v504, %v158
    %vm509 = vcmp.eq.s32.totalorder %v507, %v158
    %v510 = vsel %vm508, 1, 0
    %v511 = vsel %vm509, 1, 0
    %v512 = vcvt.s32.f32 %v510
    %v513 = vcvt.s32.f32 %v511
    %v514 = vperm.slane %v149, 1
    %v515 = vperm.slane %v150, 1
    %v516 = vperm.slane %v151, 1
    %v517 = vperm.slane %v152, 1
    %v518 = vperm.slane %v153, 1
    %v519 = vperm.slane %v154, 1
    %520 = vmatpush.msra.mxu0 %v143
    %521 = vmatpush.msra.mxu0 %v137
    %522 = vmatpush.msra.mxu0 %v131
    %523 = vmatpush.msra.mxu0 %v125
    %524 = vmatpush.msra.mxu0 %v119
    %525 = vmatpush.msra.mxu0 %v113
    %526 = vmatpush.msra.mxu0 %v107
    %527 = vmatpush.msra.mxu0 %v101
    %528 = vmatpush.msra.mxu0 %v95
    %529 = vmatpush.msra.mxu0 %v89
    %530 = vmatpush.msra.mxu0 %v83
    %531 = vmatpush.msra.mxu0 %v77
    %532 = vmatpush.msra.mxu0 %v71
    %533 = vmatpush.msra.mxu0 %v65
    %534 = vmatpush.msra.mxu0 %v59
    %535 = vmatpush.msra.mxu0 %v53
    %536 = vmatmul.f32.gmra.mxu0 %v512
    %v537 = vpop.f32.mrf.mxu0
    %v538 = vadd.f32 %v514, %v537
    %539 = vmatmul.f32.gmra.mxu0 %v513
    %v540 = vpop.f32.mrf.mxu0
    %v541 = vadd.f32 %v514, %v540
    %542 = vdwg.mxu0
    %543 = vmatpush.msra.mxu0 %v144
    %544 = vmatpush.msra.mxu0 %v138
    %545 = vmatpush.msra.mxu0 %v132
    %546 = vmatpush.msra.mxu0 %v126
    %547 = vmatpush.msra.mxu0 %v120
    %548 = vmatpush.msra.mxu0 %v114
    %549 = vmatpush.msra.mxu0 %v108
    %550 = vmatpush.msra.mxu0 %v102
    %551 = vmatpush.msra.mxu0 %v96
    %552 = vmatpush.msra.mxu0 %v90
    %553 = vmatpush.msra.mxu0 %v84
    %554 = vmatpush.msra.mxu0 %v78
    %555 = vmatpush.msra.mxu0 %v72
    %556 = vmatpush.msra.mxu0 %v66
    %557 = vmatpush.msra.mxu0 %v60
    %558 = vmatpush.msra.mxu0 %v54
    %559 = vmatmul.f32.gmra.mxu0 %v512
    %v560 = vpop.f32.mrf.mxu0
    %v561 = vadd.f32 %v515, %v560
    %562 = vmatmul.f32.gmra.mxu0 %v513
    %v563 = vpop.f32.mrf.mxu0
    %v564 = vadd.f32 %v515, %v563
    %565 = vdwg.mxu0
    %566 = vmatpush.msra.mxu0 %v145
    %567 = vmatpush.msra.mxu0 %v139
    %568 = vmatpush.msra.mxu0 %v133
    %569 = vmatpush.msra.mxu0 %v127
    %570 = vmatpush.msra.mxu0 %v121
    %571 = vmatpush.msra.mxu0 %v115
    %572 = vmatpush.msra.mxu0 %v109
    %573 = vmatpush.msra.mxu0 %v103
    %574 = vmatpush.msra.mxu0 %v97
    %575 = vmatpush.msra.mxu0 %v91
    %576 = vmatpush.msra.mxu0 %v85
    %577 = vmatpush.msra.mxu0 %v79
    %578 = vmatpush.msra.mxu0 %v73
    %579 = vmatpush.msra.mxu0 %v67
    %580 = vmatpush.msra.mxu0 %v61
    %581 = vmatpush.msra.mxu0 %v55
    %582 = vmatmul.f32.gmra.mxu0 %v512
    %v583 = vpop.f32.mrf.mxu0
    %v584 = vadd.f32 %v516, %v583
    %585 = vmatmul.f32.gmra.mxu0 %v513
    %v586 = vpop.f32.mrf.mxu0
    %v587 = vadd.f32 %v516, %v586
    %588 = vdwg.mxu0
    %589 = vmatpush.msra.mxu0 %v146
    %590 = vmatpush.msra.mxu0 %v140
    %591 = vmatpush.msra.mxu0 %v134
    %592 = vmatpush.msra.mxu0 %v128
    %593 = vmatpush.msra.mxu0 %v122
    %594 = vmatpush.msra.mxu0 %v116
    %595 = vmatpush.msra.mxu0 %v110
    %596 = vmatpush.msra.mxu0 %v104
    %597 = vmatpush.msra.mxu0 %v98
    %598 = vmatpush.msra.mxu0 %v92
    %599 = vmatpush.msra.mxu0 %v86
    %600 = vmatpush.msra.mxu0 %v80
    %601 = vmatpush.msra.mxu0 %v74
    %602 = vmatpush.msra.mxu0 %v68
    %603 = vmatpush.msra.mxu0 %v62
    %604 = vmatpush.msra.mxu0 %v56
    %605 = vmatmul.f32.gmra.mxu0 %v512
    %v606 = vpop.f32.mrf.mxu0
    %v607 = vadd.f32 %v517, %v606
    %608 = vmatmul.f32.gmra.mxu0 %v513
    %v609 = vpop.f32.mrf.mxu0
    %v610 = vadd.f32 %v517, %v609
    %611 = vdwg.mxu0
    %612 = vmatpush.msra.mxu0 %v147
    %613 = vmatpush.msra.mxu0 %v141
    %614 = vmatpush.msra.mxu0 %v135
    %615 = vmatpush.msra.mxu0 %v129
    %616 = vmatpush.msra.mxu0 %v123
    %617 = vmatpush.msra.mxu0 %v117
    %618 = vmatpush.msra.mxu0 %v111
    %619 = vmatpush.msra.mxu0 %v105
    %620 = vmatpush.msra.mxu0 %v99
    %621 = vmatpush.msra.mxu0 %v93
    %622 = vmatpush.msra.mxu0 %v87
    %623 = vmatpush.msra.mxu0 %v81
    %624 = vmatpush.msra.mxu0 %v75
    %625 = vmatpush.msra.mxu0 %v69
    %626 = vmatpush.msra.mxu0 %v63
    %627 = vmatpush.msra.mxu0 %v57
    %628 = vmatmul.f32.gmra.mxu0 %v512
    %v629 = vpop.f32.mrf.mxu0
    %v630 = vadd.f32 %v518, %v629
    %631 = vmatmul.f32.gmra.mxu0 %v513
    %v632 = vpop.f32.mrf.mxu0
    %v633 = vadd.f32 %v518, %v632
    %634 = vdwg.mxu0
    %635 = vmatpush.msra.mxu0 %v148
    %636 = vmatpush.msra.mxu0 %v142
    %637 = vmatpush.msra.mxu0 %v136
    %638 = vmatpush.msra.mxu0 %v130
    %639 = vmatpush.msra.mxu0 %v124
    %640 = vmatpush.msra.mxu0 %v118
    %641 = vmatpush.msra.mxu0 %v112
    %642 = vmatpush.msra.mxu0 %v106
    %643 = vmatpush.msra.mxu0 %v100
    %644 = vmatpush.msra.mxu0 %v94
    %645 = vmatpush.msra.mxu0 %v88
    %646 = vmatpush.msra.mxu0 %v82
    %647 = vmatpush.msra.mxu0 %v76
    %648 = vmatpush.msra.mxu0 %v70
    %649 = vmatpush.msra.mxu0 %v64
    %650 = vmatpush.msra.mxu0 %v58
    %651 = vmatmul.f32.gmra.mxu0 %v512
    %v652 = vpop.f32.mrf.mxu0
    %v653 = vadd.f32 %v519, %v652
    %654 = vmatmul.f32.gmra.mxu0 %v513
    %v655 = vpop.f32.mrf.mxu0
    %v656 = vadd.f32 %v519, %v655
    %657 = vdwg.mxu0
    %v658 = vadd.f32 %v538, %v561
    %v659 = vadd.f32 %v658, %v584
    %v660 = vadd.f32 %v659, %v607
    %v661 = vadd.f32 %v660, %v630
    %v662 = vadd.f32 %v661, %v653
    %663 = vadd.xlane.f32.xlu0 %v662
    %v664 = vpop.xlane.xlu0 %663
    %v665 = vadd.f32 %v541, %v564
    %v666 = vadd.f32 %v665, %v587
    %v667 = vadd.f32 %v666, %v610
    %v668 = vadd.f32 %v667, %v633
    %v669 = vadd.f32 %v668, %v656
    %670 = vadd.xlane.f32.xlu0 %v669
    %v671 = vpop.xlane.xlu0 %670
    %v672 = vmul.f32 %v664, %v335
    %v673 = vmul.f32 %v671, %v335
    %v674 = vsub.f32 %v538, %v672
    %v675 = vsub.f32 %v561, %v672
    %v676 = vsub.f32 %v584, %v672
    %v677 = vsub.f32 %v607, %v672
    %v678 = vsub.f32 %v630, %v672
    %v679 = vsub.f32 %v653, %v672
    %v680 = vsub.f32 %v541, %v673
    %v681 = vsub.f32 %v564, %v673
    %v682 = vsub.f32 %v587, %v673
    %v683 = vsub.f32 %v610, %v673
    %v684 = vsub.f32 %v633, %v673
    %v685 = vsub.f32 %v656, %v673
    %v686 = vmul.f32 %v674, %v674
    %v687 = vmul.f32 %v675, %v675
    %v688 = vmul.f32 %v676, %v676
    %v689 = vmul.f32 %v677, %v677
    %v690 = vmul.f32 %v678, %v678
    %v691 = vmul.f32 %v679, %v679
    %v692 = vmul.f32 %v680, %v680
    %v693 = vmul.f32 %v681, %v681
    %v694 = vmul.f32 %v682, %v682
    %v695 = vmul.f32 %v683, %v683
    %v696 = vmul.f32 %v684, %v684
    %v697 = vmul.f32 %v685, %v685
    %v698 = vadd.f32 %v686, %v687
    %v699 = vadd.f32 %v698, %v688
    %v700 = vadd.f32 %v699, %v689
    %v701 = vadd.f32 %v700, %v690
    %v702 = vadd.f32 %v701, %v691
    %703 = vadd.xlane.f32.xlu0 %v702
    %v704 = vpop.xlane.xlu0 %703
    %v705 = vadd.f32 %v692, %v693
    %v706 = vadd.f32 %v705, %v694
    %v707 = vadd.f32 %v706, %v695
    %v708 = vadd.f32 %v707, %v696
    %v709 = vadd.f32 %v708, %v697
    %710 = vadd.xlane.f32.xlu0 %v709
    %v711 = vpop.xlane.xlu0 %710
    %v712 = vmul.f32 %v704, %v335
    %v713 = vmul.f32 %v711, %v335
    %v714 = vadd.f32 %v712, 1e-12
    %v715 = vadd.f32 %v713, 1e-12
    %v716 = vrsqrt.pop %v714
    %v717 = vmul.f32 %v716, %v714
    %v718 = vmul.f32 %v717, %v716
    %v719 = vmul.f32 0.5, %v718
    %v720 = vsub.f32 1.5, %v719
    %v721 = vmul.f32 %v716, %v720
    %vm722 = vweird.f32 %v714
    %vm723 = vweird.f32 %v716
    %vm724 = vmor %vm722, %vm723
    %v725 = vsel %vm724, %v716, %v721
    %v726 = vrsqrt.pop %v715
    %v727 = vmul.f32 %v726, %v715
    %v728 = vmul.f32 %v727, %v726
    %v729 = vmul.f32 0.5, %v728
    %v730 = vsub.f32 1.5, %v729
    %v731 = vmul.f32 %v726, %v730
    %vm732 = vweird.f32 %v715
    %vm733 = vweird.f32 %v726
    %vm734 = vmor %vm732, %vm733
    %v735 = vsel %vm734, %v726, %v731
    %v736 = vmul.f32 %v674, %v725
    %v737 = vmul.f32 %v675, %v725
    %v738 = vmul.f32 %v676, %v725
    %v739 = vmul.f32 %v677, %v725
    %v740 = vmul.f32 %v678, %v725
    %v741 = vmul.f32 %v679, %v725
    %v742 = vmul.f32 %v680, %v735
    %v743 = vmul.f32 %v681, %v735
    %v744 = vmul.f32 %v682, %v735
    %v745 = vmul.f32 %v683, %v735
    %v746 = vmul.f32 %v684, %v735
    %v747 = vmul.f32 %v685, %v735
    %v748 = vmul.f32 %v736, %v413
    %v749 = vmul.f32 %v737, %v414
    %v750 = vmul.f32 %v738, %v415
    %v751 = vmul.f32 %v739, %v416
    %v752 = vmul.f32 %v740, %v417
    %v753 = vmul.f32 %v741, %v418
    %v754 = vmul.f32 %v742, %v413
    %v755 = vmul.f32 %v743, %v414
    %v756 = vmul.f32 %v744, %v415
    %v757 = vmul.f32 %v745, %v416
    %v758 = vmul.f32 %v746, %v417
    %v759 = vmul.f32 %v747, %v418
    %v760 = vadd.f32 %v748, %v438
    %v761 = vadd.f32 %v749, %v439
    %v762 = vadd.f32 %v750, %v440
    %v763 = vadd.f32 %v751, %v441
    %v764 = vadd.f32 %v752, %v442
    %v765 = vadd.f32 %v753, %v443
    %v766 = vadd.f32 %v754, %v438
    %v767 = vadd.f32 %v755, %v439
    %v768 = vadd.f32 %v756, %v440
    %v769 = vadd.f32 %v757, %v441
    %v770 = vadd.f32 %v758, %v442
    %v771 = vadd.f32 %v759, %v443
    %772 = vset.pattern.permute.xlu0 1
    %773 = vperm.xlu0 %772, %v466
    %v774 = vpop.permute.xlu0 %773
    %776 = vset.pattern.permute.xlu0 1
    %777 = vperm.xlu0 %776, %v467
    %v778 = vpop.permute.xlu0 %777
    %v780 = vmul.f32 %v760, %v774
    %v781 = vmul.f32 %v761, %v774
    %v782 = vmul.f32 %v762, %v774
    %v783 = vmul.f32 %v763, %v774
    %v784 = vmul.f32 %v764, %v774
    %v785 = vmul.f32 %v765, %v774
    %v786 = vmul.f32 %v766, %v778
    %v787 = vmul.f32 %v767, %v778
    %v788 = vmul.f32 %v768, %v778
    %v789 = vmul.f32 %v769, %v778
    %v790 = vmul.f32 %v770, %v778
    %v791 = vmul.f32 %v771, %v778
    %v792 = vadd.f32 %v490, %v780
    %v793 = vadd.f32 %v491, %v781
    %v794 = vadd.f32 %v492, %v782
    %v795 = vadd.f32 %v493, %v783
    %v796 = vadd.f32 %v494, %v784
    %v797 = vadd.f32 %v495, %v785
    %v798 = vadd.f32 %v496, %v786
    %v799 = vadd.f32 %v497, %v787
    %v800 = vadd.f32 %v498, %v788
    %v801 = vadd.f32 %v499, %v789
    %v802 = vadd.f32 %v500, %v790
    %v803 = vadd.f32 %v501, %v791
    %804 = vset.pattern.permute.xlu0 2
    %805 = vperm.xlu0 %804, %v51
    %v806 = vpop.permute.xlu0 %805
    %807 = vset.pattern.permute.xlu0 2
    %808 = vperm.xlu0 %807, %v52
    %v809 = vpop.permute.xlu0 %808
    %vm810 = vcmp.eq.s32.totalorder %v806, %v158
    %vm811 = vcmp.eq.s32.totalorder %v809, %v158
    %v812 = vsel %vm810, 1, 0
    %v813 = vsel %vm811, 1, 0
    %v814 = vcvt.s32.f32 %v812
    %v815 = vcvt.s32.f32 %v813
    %v816 = vperm.slane %v149, 2
    %v817 = vperm.slane %v150, 2
    %v818 = vperm.slane %v151, 2
    %v819 = vperm.slane %v152, 2
    %v820 = vperm.slane %v153, 2
    %v821 = vperm.slane %v154, 2
    %822 = vmatpush.msra.mxu0 %v143
    %823 = vmatpush.msra.mxu0 %v137
    %824 = vmatpush.msra.mxu0 %v131
    %825 = vmatpush.msra.mxu0 %v125
    %826 = vmatpush.msra.mxu0 %v119
    %827 = vmatpush.msra.mxu0 %v113
    %828 = vmatpush.msra.mxu0 %v107
    %829 = vmatpush.msra.mxu0 %v101
    %830 = vmatpush.msra.mxu0 %v95
    %831 = vmatpush.msra.mxu0 %v89
    %832 = vmatpush.msra.mxu0 %v83
    %833 = vmatpush.msra.mxu0 %v77
    %834 = vmatpush.msra.mxu0 %v71
    %835 = vmatpush.msra.mxu0 %v65
    %836 = vmatpush.msra.mxu0 %v59
    %837 = vmatpush.msra.mxu0 %v53
    %838 = vmatmul.f32.gmra.mxu0 %v814
    %v839 = vpop.f32.mrf.mxu0
    %v840 = vadd.f32 %v816, %v839
    %841 = vmatmul.f32.gmra.mxu0 %v815
    %v842 = vpop.f32.mrf.mxu0
    %v843 = vadd.f32 %v816, %v842
    %844 = vdwg.mxu0
    %845 = vmatpush.msra.mxu0 %v144
    %846 = vmatpush.msra.mxu0 %v138
    %847 = vmatpush.msra.mxu0 %v132
    %848 = vmatpush.msra.mxu0 %v126
    %849 = vmatpush.msra.mxu0 %v120
    %850 = vmatpush.msra.mxu0 %v114
    %851 = vmatpush.msra.mxu0 %v108
    %852 = vmatpush.msra.mxu0 %v102
    %853 = vmatpush.msra.mxu0 %v96
    %854 = vmatpush.msra.mxu0 %v90
    %855 = vmatpush.msra.mxu0 %v84
    %856 = vmatpush.msra.mxu0 %v78
    %857 = vmatpush.msra.mxu0 %v72
    %858 = vmatpush.msra.mxu0 %v66
    %859 = vmatpush.msra.mxu0 %v60
    %860 = vmatpush.msra.mxu0 %v54
    %861 = vmatmul.f32.gmra.mxu0 %v814
    %v862 = vpop.f32.mrf.mxu0
    %v863 = vadd.f32 %v817, %v862
    %864 = vmatmul.f32.gmra.mxu0 %v815
    %v865 = vpop.f32.mrf.mxu0
    %v866 = vadd.f32 %v817, %v865
    %867 = vdwg.mxu0
    %868 = vmatpush.msra.mxu0 %v145
    %869 = vmatpush.msra.mxu0 %v139
    %870 = vmatpush.msra.mxu0 %v133
    %871 = vmatpush.msra.mxu0 %v127
    %872 = vmatpush.msra.mxu0 %v121
    %873 = vmatpush.msra.mxu0 %v115
    %874 = vmatpush.msra.mxu0 %v109
    %875 = vmatpush.msra.mxu0 %v103
    %876 = vmatpush.msra.mxu0 %v97
    %877 = vmatpush.msra.mxu0 %v91
    %878 = vmatpush.msra.mxu0 %v85
    %879 = vmatpush.msra.mxu0 %v79
    %880 = vmatpush.msra.mxu0 %v73
    %881 = vmatpush.msra.mxu0 %v67
    %882 = vmatpush.msra.mxu0 %v61
    %883 = vmatpush.msra.mxu0 %v55
    %884 = vmatmul.f32.gmra.mxu0 %v814
    %v885 = vpop.f32.mrf.mxu0
    %v886 = vadd.f32 %v818, %v885
    %887 = vmatmul.f32.gmra.mxu0 %v815
    %v888 = vpop.f32.mrf.mxu0
    %v889 = vadd.f32 %v818, %v888
    %890 = vdwg.mxu0
    %891 = vmatpush.msra.mxu0 %v146
    %892 = vmatpush.msra.mxu0 %v140
    %893 = vmatpush.msra.mxu0 %v134
    %894 = vmatpush.msra.mxu0 %v128
    %895 = vmatpush.msra.mxu0 %v122
    %896 = vmatpush.msra.mxu0 %v116
    %897 = vmatpush.msra.mxu0 %v110
    %898 = vmatpush.msra.mxu0 %v104
    %899 = vmatpush.msra.mxu0 %v98
    %900 = vmatpush.msra.mxu0 %v92
    %901 = vmatpush.msra.mxu0 %v86
    %902 = vmatpush.msra.mxu0 %v80
    %903 = vmatpush.msra.mxu0 %v74
    %904 = vmatpush.msra.mxu0 %v68
    %905 = vmatpush.msra.mxu0 %v62
    %906 = vmatpush.msra.mxu0 %v56
    %907 = vmatmul.f32.gmra.mxu0 %v814
    %v908 = vpop.f32.mrf.mxu0
    %v909 = vadd.f32 %v819, %v908
    %910 = vmatmul.f32.gmra.mxu0 %v815
    %v911 = vpop.f32.mrf.mxu0
    %v912 = vadd.f32 %v819, %v911
    %913 = vdwg.mxu0
    %914 = vmatpush.msra.mxu0 %v147
    %915 = vmatpush.msra.mxu0 %v141
    %916 = vmatpush.msra.mxu0 %v135
    %917 = vmatpush.msra.mxu0 %v129
    %918 = vmatpush.msra.mxu0 %v123
    %919 = vmatpush.msra.mxu0 %v117
    %920 = vmatpush.msra.mxu0 %v111
    %921 = vmatpush.msra.mxu0 %v105
    %922 = vmatpush.msra.mxu0 %v99
    %923 = vmatpush.msra.mxu0 %v93
    %924 = vmatpush.msra.mxu0 %v87
    %925 = vmatpush.msra.mxu0 %v81
    %926 = vmatpush.msra.mxu0 %v75
    %927 = vmatpush.msra.mxu0 %v69
    %928 = vmatpush.msra.mxu0 %v63
    %929 = vmatpush.msra.mxu0 %v57
    %930 = vmatmul.f32.gmra.mxu0 %v814
    %v931 = vpop.f32.mrf.mxu0
    %v932 = vadd.f32 %v820, %v931
    %933 = vmatmul.f32.gmra.mxu0 %v815
    %v934 = vpop.f32.mrf.mxu0
    %v935 = vadd.f32 %v820, %v934
    %936 = vdwg.mxu0
    %937 = vmatpush.msra.mxu0 %v148
    %938 = vmatpush.msra.mxu0 %v142
    %939 = vmatpush.msra.mxu0 %v136
    %940 = vmatpush.msra.mxu0 %v130
    %941 = vmatpush.msra.mxu0 %v124
    %942 = vmatpush.msra.mxu0 %v118
    %943 = vmatpush.msra.mxu0 %v112
    %944 = vmatpush.msra.mxu0 %v106
    %945 = vmatpush.msra.mxu0 %v100
    %946 = vmatpush.msra.mxu0 %v94
    %947 = vmatpush.msra.mxu0 %v88
    %948 = vmatpush.msra.mxu0 %v82
    %949 = vmatpush.msra.mxu0 %v76
    %950 = vmatpush.msra.mxu0 %v70
    %951 = vmatpush.msra.mxu0 %v64
    %952 = vmatpush.msra.mxu0 %v58
    %953 = vmatmul.f32.gmra.mxu0 %v814
    %v954 = vpop.f32.mrf.mxu0
    %v955 = vadd.f32 %v821, %v954
    %956 = vmatmul.f32.gmra.mxu0 %v815
    %v957 = vpop.f32.mrf.mxu0
    %v958 = vadd.f32 %v821, %v957
    %959 = vdwg.mxu0
    %v960 = vadd.f32 %v840, %v863
    %v961 = vadd.f32 %v960, %v886
    %v962 = vadd.f32 %v961, %v909
    %v963 = vadd.f32 %v962, %v932
    %v964 = vadd.f32 %v963, %v955
    %965 = vadd.xlane.f32.xlu0 %v964
    %v966 = vpop.xlane.xlu0 %965
    %v967 = vadd.f32 %v843, %v866
    %v968 = vadd.f32 %v967, %v889
    %v969 = vadd.f32 %v968, %v912
    %v970 = vadd.f32 %v969, %v935
    %v971 = vadd.f32 %v970, %v958
    %972 = vadd.xlane.f32.xlu0 %v971
    %v973 = vpop.xlane.xlu0 %972
    %v974 = vmul.f32 %v966, %v335
    %v975 = vmul.f32 %v973, %v335
    %v976 = vsub.f32 %v840, %v974
    %v977 = vsub.f32 %v863, %v974
    %v978 = vsub.f32 %v886, %v974
    %v979 = vsub.f32 %v909, %v974
    %v980 = vsub.f32 %v932, %v974
    %v981 = vsub.f32 %v955, %v974
    %v982 = vsub.f32 %v843, %v975
    %v983 = vsub.f32 %v866, %v975
    %v984 = vsub.f32 %v889, %v975
    %v985 = vsub.f32 %v912, %v975
    %v986 = vsub.f32 %v935, %v975
    %v987 = vsub.f32 %v958, %v975
    %v988 = vmul.f32 %v976, %v976
    %v989 = vmul.f32 %v977, %v977
    %v990 = vmul.f32 %v978, %v978
    %v991 = vmul.f32 %v979, %v979
    %v992 = vmul.f32 %v980, %v980
    %v993 = vmul.f32 %v981, %v981
    %v994 = vmul.f32 %v982, %v982
    %v995 = vmul.f32 %v983, %v983
    %v996 = vmul.f32 %v984, %v984
    %v997 = vmul.f32 %v985, %v985
    %v998 = vmul.f32 %v986, %v986
    %v999 = vmul.f32 %v987, %v987
    %v1000 = vadd.f32 %v988, %v989
    %v1001 = vadd.f32 %v1000, %v990
    %v1002 = vadd.f32 %v1001, %v991
    %v1003 = vadd.f32 %v1002, %v992
    %v1004 = vadd.f32 %v1003, %v993
    %1005 = vadd.xlane.f32.xlu0 %v1004
    %v1006 = vpop.xlane.xlu0 %1005
    %v1007 = vadd.f32 %v994, %v995
    %v1008 = vadd.f32 %v1007, %v996
    %v1009 = vadd.f32 %v1008, %v997
    %v1010 = vadd.f32 %v1009, %v998
    %v1011 = vadd.f32 %v1010, %v999
    %1012 = vadd.xlane.f32.xlu0 %v1011
    %v1013 = vpop.xlane.xlu0 %1012
    %v1014 = vmul.f32 %v1006, %v335
    %v1015 = vmul.f32 %v1013, %v335
    %v1016 = vadd.f32 %v1014, 1e-12
    %v1017 = vadd.f32 %v1015, 1e-12
    %v1018 = vrsqrt.pop %v1016
    %v1019 = vmul.f32 %v1018, %v1016
    %v1020 = vmul.f32 %v1019, %v1018
    %v1021 = vmul.f32 0.5, %v1020
    %v1022 = vsub.f32 1.5, %v1021
    %v1023 = vmul.f32 %v1018, %v1022
    %vm1024 = vweird.f32 %v1016
    %vm1025 = vweird.f32 %v1018
    %vm1026 = vmor %vm1024, %vm1025
    %v1027 = vsel %vm1026, %v1018, %v1023
    %v1028 = vrsqrt.pop %v1017
    %v1029 = vmul.f32 %v1028, %v1017
    %v1030 = vmul.f32 %v1029, %v1028
    %v1031 = vmul.f32 0.5, %v1030
    %v1032 = vsub.f32 1.5, %v1031
    %v1033 = vmul.f32 %v1028, %v1032
    %vm1034 = vweird.f32 %v1017
    %vm1035 = vweird.f32 %v1028
    %vm1036 = vmor %vm1034, %vm1035
    %v1037 = vsel %vm1036, %v1028, %v1033
    %v1038 = vmul.f32 %v976, %v1027
    %v1039 = vmul.f32 %v977, %v1027
    %v1040 = vmul.f32 %v978, %v1027
    %v1041 = vmul.f32 %v979, %v1027
    %v1042 = vmul.f32 %v980, %v1027
    %v1043 = vmul.f32 %v981, %v1027
    %v1044 = vmul.f32 %v982, %v1037
    %v1045 = vmul.f32 %v983, %v1037
    %v1046 = vmul.f32 %v984, %v1037
    %v1047 = vmul.f32 %v985, %v1037
    %v1048 = vmul.f32 %v986, %v1037
    %v1049 = vmul.f32 %v987, %v1037
    %v1050 = vmul.f32 %v1038, %v413
    %v1051 = vmul.f32 %v1039, %v414
    %v1052 = vmul.f32 %v1040, %v415
    %v1053 = vmul.f32 %v1041, %v416
    %v1054 = vmul.f32 %v1042, %v417
    %v1055 = vmul.f32 %v1043, %v418
    %v1056 = vmul.f32 %v1044, %v413
    %v1057 = vmul.f32 %v1045, %v414
    %v1058 = vmul.f32 %v1046, %v415
    %v1059 = vmul.f32 %v1047, %v416
    %v1060 = vmul.f32 %v1048, %v417
    %v1061 = vmul.f32 %v1049, %v418
    %v1062 = vadd.f32 %v1050, %v438
    %v1063 = vadd.f32 %v1051, %v439
    %v1064 = vadd.f32 %v1052, %v440
    %v1065 = vadd.f32 %v1053, %v441
    %v1066 = vadd.f32 %v1054, %v442
    %v1067 = vadd.f32 %v1055, %v443
    %v1068 = vadd.f32 %v1056, %v438
    %v1069 = vadd.f32 %v1057, %v439
    %v1070 = vadd.f32 %v1058, %v440
    %v1071 = vadd.f32 %v1059, %v441
    %v1072 = vadd.f32 %v1060, %v442
    %v1073 = vadd.f32 %v1061, %v443
    %1074 = vset.pattern.permute.xlu0 2
    %1075 = vperm.xlu0 %1074, %v466
    %v1076 = vpop.permute.xlu0 %1075
    %1078 = vset.pattern.permute.xlu0 2
    %1079 = vperm.xlu0 %1078, %v467
    %v1080 = vpop.permute.xlu0 %1079
    %v1082 = vmul.f32 %v1062, %v1076
    %v1083 = vmul.f32 %v1063, %v1076
    %v1084 = vmul.f32 %v1064, %v1076
    %v1085 = vmul.f32 %v1065, %v1076
    %v1086 = vmul.f32 %v1066, %v1076
    %v1087 = vmul.f32 %v1067, %v1076
    %v1088 = vmul.f32 %v1068, %v1080
    %v1089 = vmul.f32 %v1069, %v1080
    %v1090 = vmul.f32 %v1070, %v1080
    %v1091 = vmul.f32 %v1071, %v1080
    %v1092 = vmul.f32 %v1072, %v1080
    %v1093 = vmul.f32 %v1073, %v1080
    %v1094 = vadd.f32 %v792, %v1082
    %v1095 = vadd.f32 %v793, %v1083
    %v1096 = vadd.f32 %v794, %v1084
    %v1097 = vadd.f32 %v795, %v1085
    %v1098 = vadd.f32 %v796, %v1086
    %v1099 = vadd.f32 %v797, %v1087
    %v1100 = vadd.f32 %v798, %v1088
    %v1101 = vadd.f32 %v799, %v1089
    %v1102 = vadd.f32 %v800, %v1090
    %v1103 = vadd.f32 %v801, %v1091
    %v1104 = vadd.f32 %v802, %v1092
    %v1105 = vadd.f32 %v803, %v1093
    %1106 = vset.pattern.permute.xlu0 3
    %1107 = vperm.xlu0 %1106, %v51
    %v1108 = vpop.permute.xlu0 %1107
    %1109 = vset.pattern.permute.xlu0 3
    %1110 = vperm.xlu0 %1109, %v52
    %v1111 = vpop.permute.xlu0 %1110
    %vm1112 = vcmp.eq.s32.totalorder %v1108, %v158
    %vm1113 = vcmp.eq.s32.totalorder %v1111, %v158
    %v1114 = vsel %vm1112, 1, 0
    %v1115 = vsel %vm1113, 1, 0
    %v1116 = vcvt.s32.f32 %v1114
    %v1117 = vcvt.s32.f32 %v1115
    %v1118 = vperm.slane %v149, 3
    %v1119 = vperm.slane %v150, 3
    %v1120 = vperm.slane %v151, 3
    %v1121 = vperm.slane %v152, 3
    %v1122 = vperm.slane %v153, 3
    %v1123 = vperm.slane %v154, 3
    %1124 = vmatpush.msra.mxu0 %v143
    %1125 = vmatpush.msra.mxu0 %v137
    %1126 = vmatpush.msra.mxu0 %v131
    %1127 = vmatpush.msra.mxu0 %v125
    %1128 = vmatpush.msra.mxu0 %v119
    %1129 = vmatpush.msra.mxu0 %v113
    %1130 = vmatpush.msra.mxu0 %v107
    %1131 = vmatpush.msra.mxu0 %v101
    %1132 = vmatpush.msra.mxu0 %v95
    %1133 = vmatpush.msra.mxu0 %v89
    %1134 = vmatpush.msra.mxu0 %v83
    %1135 = vmatpush.msra.mxu0 %v77
    %1136 = vmatpush.msra.mxu0 %v71
    %1137 = vmatpush.msra.mxu0 %v65
    %1138 = vmatpush.msra.mxu0 %v59
    %1139 = vmatpush.msra.mxu0 %v53
    %1140 = vmatmul.f32.gmra.mxu0 %v1116
    %v1141 = vpop.f32.mrf.mxu0
    %v1142 = vadd.f32 %v1118, %v1141
    %1143 = vmatmul.f32.gmra.mxu0 %v1117
    %v1144 = vpop.f32.mrf.mxu0
    %v1145 = vadd.f32 %v1118, %v1144
    %1146 = vdwg.mxu0
    %1147 = vmatpush.msra.mxu0 %v144
    %1148 = vmatpush.msra.mxu0 %v138
    %1149 = vmatpush.msra.mxu0 %v132
    %1150 = vmatpush.msra.mxu0 %v126
    %1151 = vmatpush.msra.mxu0 %v120
    %1152 = vmatpush.msra.mxu0 %v114
    %1153 = vmatpush.msra.mxu0 %v108
    %1154 = vmatpush.msra.mxu0 %v102
    %1155 = vmatpush.msra.mxu0 %v96
    %1156 = vmatpush.msra.mxu0 %v90
    %1157 = vmatpush.msra.mxu0 %v84
    %1158 = vmatpush.msra.mxu0 %v78
    %1159 = vmatpush.msra.mxu0 %v72
    %1160 = vmatpush.msra.mxu0 %v66
    %1161 = vmatpush.msra.mxu0 %v60
    %1162 = vmatpush.msra.mxu0 %v54
    %1163 = vmatmul.f32.gmra.mxu0 %v1116
    %v1164 = vpop.f32.mrf.mxu0
    %v1165 = vadd.f32 %v1119, %v1164
    %1166 = vmatmul.f32.gmra.mxu0 %v1117
    %v1167 = vpop.f32.mrf.mxu0
    %v1168 = vadd.f32 %v1119, %v1167
    %1169 = vdwg.mxu0
    %1170 = vmatpush.msra.mxu0 %v145
    %1171 = vmatpush.msra.mxu0 %v139
    %1172 = vmatpush.msra.mxu0 %v133
    %1173 = vmatpush.msra.mxu0 %v127
    %1174 = vmatpush.msra.mxu0 %v121
    %1175 = vmatpush.msra.mxu0 %v115
    %1176 = vmatpush.msra.mxu0 %v109
    %1177 = vmatpush.msra.mxu0 %v103
    %1178 = vmatpush.msra.mxu0 %v97
    %1179 = vmatpush.msra.mxu0 %v91
    %1180 = vmatpush.msra.mxu0 %v85
    %1181 = vmatpush.msra.mxu0 %v79
    %1182 = vmatpush.msra.mxu0 %v73
    %1183 = vmatpush.msra.mxu0 %v67
    %1184 = vmatpush.msra.mxu0 %v61
    %1185 = vmatpush.msra.mxu0 %v55
    %1186 = vmatmul.f32.gmra.mxu0 %v1116
    %v1187 = vpop.f32.mrf.mxu0
    %v1188 = vadd.f32 %v1120, %v1187
    %1189 = vmatmul.f32.gmra.mxu0 %v1117
    %v1190 = vpop.f32.mrf.mxu0
    %v1191 = vadd.f32 %v1120, %v1190
    %1192 = vdwg.mxu0
    %1193 = vmatpush.msra.mxu0 %v146
    %1194 = vmatpush.msra.mxu0 %v140
    %1195 = vmatpush.msra.mxu0 %v134
    %1196 = vmatpush.msra.mxu0 %v128
    %1197 = vmatpush.msra.mxu0 %v122
    %1198 = vmatpush.msra.mxu0 %v116
    %1199 = vmatpush.msra.mxu0 %v110
    %1200 = vmatpush.msra.mxu0 %v104
    %1201 = vmatpush.msra.mxu0 %v98
    %1202 = vmatpush.msra.mxu0 %v92
    %1203 = vmatpush.msra.mxu0 %v86
    %1204 = vmatpush.msra.mxu0 %v80
    %1205 = vmatpush.msra.mxu0 %v74
    %1206 = vmatpush.msra.mxu0 %v68
    %1207 = vmatpush.msra.mxu0 %v62
    %1208 = vmatpush.msra.mxu0 %v56
    %1209 = vmatmul.f32.gmra.mxu0 %v1116
    %v1210 = vpop.f32.mrf.mxu0
    %v1211 = vadd.f32 %v1121, %v1210
    %1212 = vmatmul.f32.gmra.mxu0 %v1117
    %v1213 = vpop.f32.mrf.mxu0
    %v1214 = vadd.f32 %v1121, %v1213
    %1215 = vdwg.mxu0
    %1216 = vmatpush.msra.mxu0 %v147
    %1217 = vmatpush.msra.mxu0 %v141
    %1218 = vmatpush.msra.mxu0 %v135
    %1219 = vmatpush.msra.mxu0 %v129
    %1220 = vmatpush.msra.mxu0 %v123
    %1221 = vmatpush.msra.mxu0 %v117
    %1222 = vmatpush.msra.mxu0 %v111
    %1223 = vmatpush.msra.mxu0 %v105
    %1224 = vmatpush.msra.mxu0 %v99
    %1225 = vmatpush.msra.mxu0 %v93
    %1226 = vmatpush.msra.mxu0 %v87
    %1227 = vmatpush.msra.mxu0 %v81
    %1228 = vmatpush.msra.mxu0 %v75
    %1229 = vmatpush.msra.mxu0 %v69
    %1230 = vmatpush.msra.mxu0 %v63
    %1231 = vmatpush.msra.mxu0 %v57
    %1232 = vmatmul.f32.gmra.mxu0 %v1116
    %v1233 = vpop.f32.mrf.mxu0
    %v1234 = vadd.f32 %v1122, %v1233
    %1235 = vmatmul.f32.gmra.mxu0 %v1117
    %v1236 = vpop.f32.mrf.mxu0
    %v1237 = vadd.f32 %v1122, %v1236
    %1238 = vdwg.mxu0
    %1239 = vmatpush.msra.mxu0 %v148
    %1240 = vmatpush.msra.mxu0 %v142
    %1241 = vmatpush.msra.mxu0 %v136
    %1242 = vmatpush.msra.mxu0 %v130
    %1243 = vmatpush.msra.mxu0 %v124
    %1244 = vmatpush.msra.mxu0 %v118
    %1245 = vmatpush.msra.mxu0 %v112
    %1246 = vmatpush.msra.mxu0 %v106
    %1247 = vmatpush.msra.mxu0 %v100
    %1248 = vmatpush.msra.mxu0 %v94
    %1249 = vmatpush.msra.mxu0 %v88
    %1250 = vmatpush.msra.mxu0 %v82
    %1251 = vmatpush.msra.mxu0 %v76
    %1252 = vmatpush.msra.mxu0 %v70
    %1253 = vmatpush.msra.mxu0 %v64
    %1254 = vmatpush.msra.mxu0 %v58
    %1255 = vmatmul.f32.gmra.mxu0 %v1116
    %v1256 = vpop.f32.mrf.mxu0
    %v1257 = vadd.f32 %v1123, %v1256
    %1258 = vmatmul.f32.gmra.mxu0 %v1117
    %v1259 = vpop.f32.mrf.mxu0
    %v1260 = vadd.f32 %v1123, %v1259
    %1261 = vdwg.mxu0
    %v1262 = vadd.f32 %v1142, %v1165
    %v1263 = vadd.f32 %v1262, %v1188
    %v1264 = vadd.f32 %v1263, %v1211
    %v1265 = vadd.f32 %v1264, %v1234
    %v1266 = vadd.f32 %v1265, %v1257
    %1267 = vadd.xlane.f32.xlu0 %v1266
    %v1268 = vpop.xlane.xlu0 %1267
    %v1269 = vadd.f32 %v1145, %v1168
    %v1270 = vadd.f32 %v1269, %v1191
    %v1271 = vadd.f32 %v1270, %v1214
    %v1272 = vadd.f32 %v1271, %v1237
    %v1273 = vadd.f32 %v1272, %v1260
    %1274 = vadd.xlane.f32.xlu0 %v1273
    %v1275 = vpop.xlane.xlu0 %1274
    %v1276 = vmul.f32 %v1268, %v335
    %v1277 = vmul.f32 %v1275, %v335
    %v1278 = vsub.f32 %v1142, %v1276
    %v1279 = vsub.f32 %v1165, %v1276
    %v1280 = vsub.f32 %v1188, %v1276
    %v1281 = vsub.f32 %v1211, %v1276
    %v1282 = vsub.f32 %v1234, %v1276
    %v1283 = vsub.f32 %v1257, %v1276
    %v1284 = vsub.f32 %v1145, %v1277
    %v1285 = vsub.f32 %v1168, %v1277
    %v1286 = vsub.f32 %v1191, %v1277
    %v1287 = vsub.f32 %v1214, %v1277
    %v1288 = vsub.f32 %v1237, %v1277
    %v1289 = vsub.f32 %v1260, %v1277
    %v1290 = vmul.f32 %v1278, %v1278
    %v1291 = vmul.f32 %v1279, %v1279
    %v1292 = vmul.f32 %v1280, %v1280
    %v1293 = vmul.f32 %v1281, %v1281
    %v1294 = vmul.f32 %v1282, %v1282
    %v1295 = vmul.f32 %v1283, %v1283
    %v1296 = vmul.f32 %v1284, %v1284
    %v1297 = vmul.f32 %v1285, %v1285
    %v1298 = vmul.f32 %v1286, %v1286
    %v1299 = vmul.f32 %v1287, %v1287
    %v1300 = vmul.f32 %v1288, %v1288
    %v1301 = vmul.f32 %v1289, %v1289
    %v1302 = vadd.f32 %v1290, %v1291
    %v1303 = vadd.f32 %v1302, %v1292
    %v1304 = vadd.f32 %v1303, %v1293
    %v1305 = vadd.f32 %v1304, %v1294
    %v1306 = vadd.f32 %v1305, %v1295
    %1307 = vadd.xlane.f32.xlu0 %v1306
    %v1308 = vpop.xlane.xlu0 %1307
    %v1309 = vadd.f32 %v1296, %v1297
    %v1310 = vadd.f32 %v1309, %v1298
    %v1311 = vadd.f32 %v1310, %v1299
    %v1312 = vadd.f32 %v1311, %v1300
    %v1313 = vadd.f32 %v1312, %v1301
    %1314 = vadd.xlane.f32.xlu0 %v1313
    %v1315 = vpop.xlane.xlu0 %1314
    %v1316 = vmul.f32 %v1308, %v335
    %v1317 = vmul.f32 %v1315, %v335
    %v1318 = vadd.f32 %v1316, 1e-12
    %v1319 = vadd.f32 %v1317, 1e-12
    %v1320 = vrsqrt.pop %v1318
    %v1321 = vmul.f32 %v1320, %v1318
    %v1322 = vmul.f32 %v1321, %v1320
    %v1323 = vmul.f32 0.5, %v1322
    %v1324 = vsub.f32 1.5, %v1323
    %v1325 = vmul.f32 %v1320, %v1324
    %vm1326 = vweird.f32 %v1318
    %vm1327 = vweird.f32 %v1320
    %vm1328 = vmor %vm1326, %vm1327
    %v1329 = vsel %vm1328, %v1320, %v1325
    %v1330 = vrsqrt.pop %v1319
    %v1331 = vmul.f32 %v1330, %v1319
    %v1332 = vmul.f32 %v1331, %v1330
    %v1333 = vmul.f32 0.5, %v1332
    %v1334 = vsub.f32 1.5, %v1333
    %v1335 = vmul.f32 %v1330, %v1334
    %vm1336 = vweird.f32 %v1319
    %vm1337 = vweird.f32 %v1330
    %vm1338 = vmor %vm1336, %vm1337
    %v1339 = vsel %vm1338, %v1330, %v1335
    %v1340 = vmul.f32 %v1278, %v1329
    %v1341 = vmul.f32 %v1279, %v1329
    %v1342 = vmul.f32 %v1280, %v1329
    %v1343 = vmul.f32 %v1281, %v1329
    %v1344 = vmul.f32 %v1282, %v1329
    %v1345 = vmul.f32 %v1283, %v1329
    %v1346 = vmul.f32 %v1284, %v1339
    %v1347 = vmul.f32 %v1285, %v1339
    %v1348 = vmul.f32 %v1286, %v1339
    %v1349 = vmul.f32 %v1287, %v1339
    %v1350 = vmul.f32 %v1288, %v1339
    %v1351 = vmul.f32 %v1289, %v1339
    %v1352 = vmul.f32 %v1340, %v413
    %v1353 = vmul.f32 %v1341, %v414
    %v1354 = vmul.f32 %v1342, %v415
    %v1355 = vmul.f32 %v1343, %v416
    %v1356 = vmul.f32 %v1344, %v417
    %v1357 = vmul.f32 %v1345, %v418
    %v1358 = vmul.f32 %v1346, %v413
    %v1359 = vmul.f32 %v1347, %v414
    %v1360 = vmul.f32 %v1348, %v415
    %v1361 = vmul.f32 %v1349, %v416
    %v1362 = vmul.f32 %v1350, %v417
    %v1363 = vmul.f32 %v1351, %v418
    %v1364 = vadd.f32 %v1352, %v438
    %v1365 = vadd.f32 %v1353, %v439
    %v1366 = vadd.f32 %v1354, %v440
    %v1367 = vadd.f32 %v1355, %v441
    %v1368 = vadd.f32 %v1356, %v442
    %v1369 = vadd.f32 %v1357, %v443
    %v1370 = vadd.f32 %v1358, %v438
    %v1371 = vadd.f32 %v1359, %v439
    %v1372 = vadd.f32 %v1360, %v440
    %v1373 = vadd.f32 %v1361, %v441
    %v1374 = vadd.f32 %v1362, %v442
    %v1375 = vadd.f32 %v1363, %v443
    %1376 = vset.pattern.permute.xlu0 3
    %1377 = vperm.xlu0 %1376, %v466
    %v1378 = vpop.permute.xlu0 %1377
    %1380 = vset.pattern.permute.xlu0 3
    %1381 = vperm.xlu0 %1380, %v467
    %v1382 = vpop.permute.xlu0 %1381
    %v1384 = vmul.f32 %v1364, %v1378
    %v1385 = vmul.f32 %v1365, %v1378
    %v1386 = vmul.f32 %v1366, %v1378
    %v1387 = vmul.f32 %v1367, %v1378
    %v1388 = vmul.f32 %v1368, %v1378
    %v1389 = vmul.f32 %v1369, %v1378
    %v1390 = vmul.f32 %v1370, %v1382
    %v1391 = vmul.f32 %v1371, %v1382
    %v1392 = vmul.f32 %v1372, %v1382
    %v1393 = vmul.f32 %v1373, %v1382
    %v1394 = vmul.f32 %v1374, %v1382
    %v1395 = vmul.f32 %v1375, %v1382
    %v1396 = vadd.f32 %v1094, %v1384
    %v1397 = vadd.f32 %v1095, %v1385
    %v1398 = vadd.f32 %v1096, %v1386
    %v1399 = vadd.f32 %v1097, %v1387
    %v1400 = vadd.f32 %v1098, %v1388
    %v1401 = vadd.f32 %v1099, %v1389
    %v1402 = vadd.f32 %v1100, %v1390
    %v1403 = vadd.f32 %v1101, %v1391
    %v1404 = vadd.f32 %v1102, %v1392
    %v1405 = vadd.f32 %v1103, %v1393
    %v1406 = vadd.f32 %v1104, %v1394
    %v1407 = vadd.f32 %v1105, %v1395
    %1408 = vset.pattern.permute.xlu0 4
    %1409 = vperm.xlu0 %1408, %v51
    %v1410 = vpop.permute.xlu0 %1409
    %1411 = vset.pattern.permute.xlu0 4
    %1412 = vperm.xlu0 %1411, %v52
    %v1413 = vpop.permute.xlu0 %1412
    %vm1414 = vcmp.eq.s32.totalorder %v1410, %v158
    %vm1415 = vcmp.eq.s32.totalorder %v1413, %v158
    %v1416 = vsel %vm1414, 1, 0
    %v1417 = vsel %vm1415, 1, 0
    %v1418 = vcvt.s32.f32 %v1416
    %v1419 = vcvt.s32.f32 %v1417
    %v1420 = vperm.slane %v149, 4
    %v1421 = vperm.slane %v150, 4
    %v1422 = vperm.slane %v151, 4
    %v1423 = vperm.slane %v152, 4
    %v1424 = vperm.slane %v153, 4
    %v1425 = vperm.slane %v154, 4
    %1426 = vmatpush.msra.mxu0 %v143
    %1427 = vmatpush.msra.mxu0 %v137
    %1428 = vmatpush.msra.mxu0 %v131
    %1429 = vmatpush.msra.mxu0 %v125
    %1430 = vmatpush.msra.mxu0 %v119
    %1431 = vmatpush.msra.mxu0 %v113
    %1432 = vmatpush.msra.mxu0 %v107
    %1433 = vmatpush.msra.mxu0 %v101
    %1434 = vmatpush.msra.mxu0 %v95
    %1435 = vmatpush.msra.mxu0 %v89
    %1436 = vmatpush.msra.mxu0 %v83
    %1437 = vmatpush.msra.mxu0 %v77
    %1438 = vmatpush.msra.mxu0 %v71
    %1439 = vmatpush.msra.mxu0 %v65
    %1440 = vmatpush.msra.mxu0 %v59
    %1441 = vmatpush.msra.mxu0 %v53
    %1442 = vmatmul.f32.gmra.mxu0 %v1418
    %v1443 = vpop.f32.mrf.mxu0
    %v1444 = vadd.f32 %v1420, %v1443
    %1445 = vmatmul.f32.gmra.mxu0 %v1419
    %v1446 = vpop.f32.mrf.mxu0
    %v1447 = vadd.f32 %v1420, %v1446
    %1448 = vdwg.mxu0
    %1449 = vmatpush.msra.mxu0 %v144
    %1450 = vmatpush.msra.mxu0 %v138
    %1451 = vmatpush.msra.mxu0 %v132
    %1452 = vmatpush.msra.mxu0 %v126
    %1453 = vmatpush.msra.mxu0 %v120
    %1454 = vmatpush.msra.mxu0 %v114
    %1455 = vmatpush.msra.mxu0 %v108
    %1456 = vmatpush.msra.mxu0 %v102
    %1457 = vmatpush.msra.mxu0 %v96
    %1458 = vmatpush.msra.mxu0 %v90
    %1459 = vmatpush.msra.mxu0 %v84
    %1460 = vmatpush.msra.mxu0 %v78
    %1461 = vmatpush.msra.mxu0 %v72
    %1462 = vmatpush.msra.mxu0 %v66
    %1463 = vmatpush.msra.mxu0 %v60
    %1464 = vmatpush.msra.mxu0 %v54
    %1465 = vmatmul.f32.gmra.mxu0 %v1418
    %v1466 = vpop.f32.mrf.mxu0
    %v1467 = vadd.f32 %v1421, %v1466
    %1468 = vmatmul.f32.gmra.mxu0 %v1419
    %v1469 = vpop.f32.mrf.mxu0
    %v1470 = vadd.f32 %v1421, %v1469
    %1471 = vdwg.mxu0
    %1472 = vmatpush.msra.mxu0 %v145
    %1473 = vmatpush.msra.mxu0 %v139
    %1474 = vmatpush.msra.mxu0 %v133
    %1475 = vmatpush.msra.mxu0 %v127
    %1476 = vmatpush.msra.mxu0 %v121
    %1477 = vmatpush.msra.mxu0 %v115
    %1478 = vmatpush.msra.mxu0 %v109
    %1479 = vmatpush.msra.mxu0 %v103
    %1480 = vmatpush.msra.mxu0 %v97
    %1481 = vmatpush.msra.mxu0 %v91
    %1482 = vmatpush.msra.mxu0 %v85
    %1483 = vmatpush.msra.mxu0 %v79
    %1484 = vmatpush.msra.mxu0 %v73
    %1485 = vmatpush.msra.mxu0 %v67
    %1486 = vmatpush.msra.mxu0 %v61
    %1487 = vmatpush.msra.mxu0 %v55
    %1488 = vmatmul.f32.gmra.mxu0 %v1418
    %v1489 = vpop.f32.mrf.mxu0
    %v1490 = vadd.f32 %v1422, %v1489
    %1491 = vmatmul.f32.gmra.mxu0 %v1419
    %v1492 = vpop.f32.mrf.mxu0
    %v1493 = vadd.f32 %v1422, %v1492
    %1494 = vdwg.mxu0
    %1495 = vmatpush.msra.mxu0 %v146
    %1496 = vmatpush.msra.mxu0 %v140
    %1497 = vmatpush.msra.mxu0 %v134
    %1498 = vmatpush.msra.mxu0 %v128
    %1499 = vmatpush.msra.mxu0 %v122
    %1500 = vmatpush.msra.mxu0 %v116
    %1501 = vmatpush.msra.mxu0 %v110
    %1502 = vmatpush.msra.mxu0 %v104
    %1503 = vmatpush.msra.mxu0 %v98
    %1504 = vmatpush.msra.mxu0 %v92
    %1505 = vmatpush.msra.mxu0 %v86
    %1506 = vmatpush.msra.mxu0 %v80
    %1507 = vmatpush.msra.mxu0 %v74
    %1508 = vmatpush.msra.mxu0 %v68
    %1509 = vmatpush.msra.mxu0 %v62
    %1510 = vmatpush.msra.mxu0 %v56
    %1511 = vmatmul.f32.gmra.mxu0 %v1418
    %v1512 = vpop.f32.mrf.mxu0
    %v1513 = vadd.f32 %v1423, %v1512
    %1514 = vmatmul.f32.gmra.mxu0 %v1419
    %v1515 = vpop.f32.mrf.mxu0
    %v1516 = vadd.f32 %v1423, %v1515
    %1517 = vdwg.mxu0
    %1518 = vmatpush.msra.mxu0 %v147
    %1519 = vmatpush.msra.mxu0 %v141
    %1520 = vmatpush.msra.mxu0 %v135
    %1521 = vmatpush.msra.mxu0 %v129
    %1522 = vmatpush.msra.mxu0 %v123
    %1523 = vmatpush.msra.mxu0 %v117
    %1524 = vmatpush.msra.mxu0 %v111
    %1525 = vmatpush.msra.mxu0 %v105
    %1526 = vmatpush.msra.mxu0 %v99
    %1527 = vmatpush.msra.mxu0 %v93
    %1528 = vmatpush.msra.mxu0 %v87
    %1529 = vmatpush.msra.mxu0 %v81
    %1530 = vmatpush.msra.mxu0 %v75
    %1531 = vmatpush.msra.mxu0 %v69
    %1532 = vmatpush.msra.mxu0 %v63
    %1533 = vmatpush.msra.mxu0 %v57
    %1534 = vmatmul.f32.gmra.mxu0 %v1418
    %v1535 = vpop.f32.mrf.mxu0
    %v1536 = vadd.f32 %v1424, %v1535
    %1537 = vmatmul.f32.gmra.mxu0 %v1419
    %v1538 = vpop.f32.mrf.mxu0
    %v1539 = vadd.f32 %v1424, %v1538
    %1540 = vdwg.mxu0
    %1541 = vmatpush.msra.mxu0 %v148
    %1542 = vmatpush.msra.mxu0 %v142
    %1543 = vmatpush.msra.mxu0 %v136
    %1544 = vmatpush.msra.mxu0 %v130
    %1545 = vmatpush.msra.mxu0 %v124
    %1546 = vmatpush.msra.mxu0 %v118
    %1547 = vmatpush.msra.mxu0 %v112
    %1548 = vmatpush.msra.mxu0 %v106
    %1549 = vmatpush.msra.mxu0 %v100
    %1550 = vmatpush.msra.mxu0 %v94
    %1551 = vmatpush.msra.mxu0 %v88
    %1552 = vmatpush.msra.mxu0 %v82
    %1553 = vmatpush.msra.mxu0 %v76
    %1554 = vmatpush.msra.mxu0 %v70
    %1555 = vmatpush.msra.mxu0 %v64
    %1556 = vmatpush.msra.mxu0 %v58
    %1557 = vmatmul.f32.gmra.mxu0 %v1418
    %v1558 = vpop.f32.mrf.mxu0
    %v1559 = vadd.f32 %v1425, %v1558
    %1560 = vmatmul.f32.gmra.mxu0 %v1419
    %v1561 = vpop.f32.mrf.mxu0
    %v1562 = vadd.f32 %v1425, %v1561
    %1563 = vdwg.mxu0
    %v1564 = vadd.f32 %v1444, %v1467
    %v1565 = vadd.f32 %v1564, %v1490
    %v1566 = vadd.f32 %v1565, %v1513
    %v1567 = vadd.f32 %v1566, %v1536
    %v1568 = vadd.f32 %v1567, %v1559
    %1569 = vadd.xlane.f32.xlu0 %v1568
    %v1570 = vpop.xlane.xlu0 %1569
    %v1571 = vadd.f32 %v1447, %v1470
    %v1572 = vadd.f32 %v1571, %v1493
    %v1573 = vadd.f32 %v1572, %v1516
    %v1574 = vadd.f32 %v1573, %v1539
    %v1575 = vadd.f32 %v1574, %v1562
    %1576 = vadd.xlane.f32.xlu0 %v1575
    %v1577 = vpop.xlane.xlu0 %1576
    %v1578 = vmul.f32 %v1570, %v335
    %v1579 = vmul.f32 %v1577, %v335
    %v1580 = vsub.f32 %v1444, %v1578
    %v1581 = vsub.f32 %v1467, %v1578
    %v1582 = vsub.f32 %v1490, %v1578
    %v1583 = vsub.f32 %v1513, %v1578
    %v1584 = vsub.f32 %v1536, %v1578
    %v1585 = vsub.f32 %v1559, %v1578
    %v1586 = vsub.f32 %v1447, %v1579
    %v1587 = vsub.f32 %v1470, %v1579
    %v1588 = vsub.f32 %v1493, %v1579
    %v1589 = vsub.f32 %v1516, %v1579
    %v1590 = vsub.f32 %v1539, %v1579
    %v1591 = vsub.f32 %v1562, %v1579
    %v1592 = vmul.f32 %v1580, %v1580
    %v1593 = vmul.f32 %v1581, %v1581
    %v1594 = vmul.f32 %v1582, %v1582
    %v1595 = vmul.f32 %v1583, %v1583
    %v1596 = vmul.f32 %v1584, %v1584
    %v1597 = vmul.f32 %v1585, %v1585
    %v1598 = vmul.f32 %v1586, %v1586
    %v1599 = vmul.f32 %v1587, %v1587
    %v1600 = vmul.f32 %v1588, %v1588
    %v1601 = vmul.f32 %v1589, %v1589
    %v1602 = vmul.f32 %v1590, %v1590
    %v1603 = vmul.f32 %v1591, %v1591
    %v1604 = vadd.f32 %v1592, %v1593
    %v1605 = vadd.f32 %v1604, %v1594
    %v1606 = vadd.f32 %v1605, %v1595
    %v1607 = vadd.f32 %v1606, %v1596
    %v1608 = vadd.f32 %v1607, %v1597
    %1609 = vadd.xlane.f32.xlu0 %v1608
    %v1610 = vpop.xlane.xlu0 %1609
    %v1611 = vadd.f32 %v1598, %v1599
    %v1612 = vadd.f32 %v1611, %v1600
    %v1613 = vadd.f32 %v1612, %v1601
    %v1614 = vadd.f32 %v1613, %v1602
    %v1615 = vadd.f32 %v1614, %v1603
    %1616 = vadd.xlane.f32.xlu0 %v1615
    %v1617 = vpop.xlane.xlu0 %1616
    %v1618 = vmul.f32 %v1610, %v335
    %v1619 = vmul.f32 %v1617, %v335
    %v1620 = vadd.f32 %v1618, 1e-12
    %v1621 = vadd.f32 %v1619, 1e-12
    %v1622 = vrsqrt.pop %v1620
    %v1623 = vmul.f32 %v1622, %v1620
    %v1624 = vmul.f32 %v1623, %v1622
    %v1625 = vmul.f32 0.5, %v1624
    %v1626 = vsub.f32 1.5, %v1625
    %v1627 = vmul.f32 %v1622, %v1626
    %vm1628 = vweird.f32 %v1620
    %vm1629 = vweird.f32 %v1622
    %vm1630 = vmor %vm1628, %vm1629
    %v1631 = vsel %vm1630, %v1622, %v1627
    %v1632 = vrsqrt.pop %v1621
    %v1633 = vmul.f32 %v1632, %v1621
    %v1634 = vmul.f32 %v1633, %v1632
    %v1635 = vmul.f32 0.5, %v1634
    %v1636 = vsub.f32 1.5, %v1635
    %v1637 = vmul.f32 %v1632, %v1636
    %vm1638 = vweird.f32 %v1621
    %vm1639 = vweird.f32 %v1632
    %vm1640 = vmor %vm1638, %vm1639
    %v1641 = vsel %vm1640, %v1632, %v1637
    %v1642 = vmul.f32 %v1580, %v1631
    %v1643 = vmul.f32 %v1581, %v1631
    %v1644 = vmul.f32 %v1582, %v1631
    %v1645 = vmul.f32 %v1583, %v1631
    %v1646 = vmul.f32 %v1584, %v1631
    %v1647 = vmul.f32 %v1585, %v1631
    %v1648 = vmul.f32 %v1586, %v1641
    %v1649 = vmul.f32 %v1587, %v1641
    %v1650 = vmul.f32 %v1588, %v1641
    %v1651 = vmul.f32 %v1589, %v1641
    %v1652 = vmul.f32 %v1590, %v1641
    %v1653 = vmul.f32 %v1591, %v1641
    %v1654 = vmul.f32 %v1642, %v413
    %v1655 = vmul.f32 %v1643, %v414
    %v1656 = vmul.f32 %v1644, %v415
    %v1657 = vmul.f32 %v1645, %v416
    %v1658 = vmul.f32 %v1646, %v417
    %v1659 = vmul.f32 %v1647, %v418
    %v1660 = vmul.f32 %v1648, %v413
    %v1661 = vmul.f32 %v1649, %v414
    %v1662 = vmul.f32 %v1650, %v415
    %v1663 = vmul.f32 %v1651, %v416
    %v1664 = vmul.f32 %v1652, %v417
    %v1665 = vmul.f32 %v1653, %v418
    %v1666 = vadd.f32 %v1654, %v438
    %v1667 = vadd.f32 %v1655, %v439
    %v1668 = vadd.f32 %v1656, %v440
    %v1669 = vadd.f32 %v1657, %v441
    %v1670 = vadd.f32 %v1658, %v442
    %v1671 = vadd.f32 %v1659, %v443
    %v1672 = vadd.f32 %v1660, %v438
    %v1673 = vadd.f32 %v1661, %v439
    %v1674 = vadd.f32 %v1662, %v440
    %v1675 = vadd.f32 %v1663, %v441
    %v1676 = vadd.f32 %v1664, %v442
    %v1677 = vadd.f32 %v1665, %v443
    %1678 = vset.pattern.permute.xlu0 4
    %1679 = vperm.xlu0 %1678, %v466
    %v1680 = vpop.permute.xlu0 %1679
    %1682 = vset.pattern.permute.xlu0 4
    %1683 = vperm.xlu0 %1682, %v467
    %v1684 = vpop.permute.xlu0 %1683
    %v1686 = vmul.f32 %v1666, %v1680
    %v1687 = vmul.f32 %v1667, %v1680
    %v1688 = vmul.f32 %v1668, %v1680
    %v1689 = vmul.f32 %v1669, %v1680
    %v1690 = vmul.f32 %v1670, %v1680
    %v1691 = vmul.f32 %v1671, %v1680
    %v1692 = vmul.f32 %v1672, %v1684
    %v1693 = vmul.f32 %v1673, %v1684
    %v1694 = vmul.f32 %v1674, %v1684
    %v1695 = vmul.f32 %v1675, %v1684
    %v1696 = vmul.f32 %v1676, %v1684
    %v1697 = vmul.f32 %v1677, %v1684
    %v1698 = vadd.f32 %v1396, %v1686
    %v1699 = vadd.f32 %v1397, %v1687
    %v1700 = vadd.f32 %v1398, %v1688
    %v1701 = vadd.f32 %v1399, %v1689
    %v1702 = vadd.f32 %v1400, %v1690
    %v1703 = vadd.f32 %v1401, %v1691
    %v1704 = vadd.f32 %v1402, %v1692
    %v1705 = vadd.f32 %v1403, %v1693
    %v1706 = vadd.f32 %v1404, %v1694
    %v1707 = vadd.f32 %v1405, %v1695
    %v1708 = vadd.f32 %v1406, %v1696
    %v1709 = vadd.f32 %v1407, %v1697
    %1710 = vset.pattern.permute.xlu0 5
    %1711 = vperm.xlu0 %1710, %v51
    %v1712 = vpop.permute.xlu0 %1711
    %1713 = vset.pattern.permute.xlu0 5
    %1714 = vperm.xlu0 %1713, %v52
    %v1715 = vpop.permute.xlu0 %1714
    %vm1716 = vcmp.eq.s32.totalorder %v1712, %v158
    %vm1717 = vcmp.eq.s32.totalorder %v1715, %v158
    %v1718 = vsel %vm1716, 1, 0
    %v1719 = vsel %vm1717, 1, 0
    %v1720 = vcvt.s32.f32 %v1718
    %v1721 = vcvt.s32.f32 %v1719
    %v1722 = vperm.slane %v149, 5
    %v1723 = vperm.slane %v150, 5
    %v1724 = vperm.slane %v151, 5
    %v1725 = vperm.slane %v152, 5
    %v1726 = vperm.slane %v153, 5
    %v1727 = vperm.slane %v154, 5
    %1728 = vmatpush.msra.mxu0 %v143
    %1729 = vmatpush.msra.mxu0 %v137
    %1730 = vmatpush.msra.mxu0 %v131
    %1731 = vmatpush.msra.mxu0 %v125
    %1732 = vmatpush.msra.mxu0 %v119
    %1733 = vmatpush.msra.mxu0 %v113
    %1734 = vmatpush.msra.mxu0 %v107
    %1735 = vmatpush.msra.mxu0 %v101
    %1736 = vmatpush.msra.mxu0 %v95
    %1737 = vmatpush.msra.mxu0 %v89
    %1738 = vmatpush.msra.mxu0 %v83
    %1739 = vmatpush.msra.mxu0 %v77
    %1740 = vmatpush.msra.mxu0 %v71
    %1741 = vmatpush.msra.mxu0 %v65
    %1742 = vmatpush.msra.mxu0 %v59
    %1743 = vmatpush.msra.mxu0 %v53
    %1744 = vmatmul.f32.gmra.mxu0 %v1720
    %v1745 = vpop.f32.mrf.mxu0
    %v1746 = vadd.f32 %v1722, %v1745
    %1747 = vmatmul.f32.gmra.mxu0 %v1721
    %v1748 = vpop.f32.mrf.mxu0
    %v1749 = vadd.f32 %v1722, %v1748
    %1750 = vdwg.mxu0
    %1751 = vmatpush.msra.mxu0 %v144
    %1752 = vmatpush.msra.mxu0 %v138
    %1753 = vmatpush.msra.mxu0 %v132
    %1754 = vmatpush.msra.mxu0 %v126
    %1755 = vmatpush.msra.mxu0 %v120
    %1756 = vmatpush.msra.mxu0 %v114
    %1757 = vmatpush.msra.mxu0 %v108
    %1758 = vmatpush.msra.mxu0 %v102
    %1759 = vmatpush.msra.mxu0 %v96
    %1760 = vmatpush.msra.mxu0 %v90
    %1761 = vmatpush.msra.mxu0 %v84
    %1762 = vmatpush.msra.mxu0 %v78
    %1763 = vmatpush.msra.mxu0 %v72
    %1764 = vmatpush.msra.mxu0 %v66
    %1765 = vmatpush.msra.mxu0 %v60
    %1766 = vmatpush.msra.mxu0 %v54
    %1767 = vmatmul.f32.gmra.mxu0 %v1720
    %v1768 = vpop.f32.mrf.mxu0
    %v1769 = vadd.f32 %v1723, %v1768
    %1770 = vmatmul.f32.gmra.mxu0 %v1721
    %v1771 = vpop.f32.mrf.mxu0
    %v1772 = vadd.f32 %v1723, %v1771
    %1773 = vdwg.mxu0
    %1774 = vmatpush.msra.mxu0 %v145
    %1775 = vmatpush.msra.mxu0 %v139
    %1776 = vmatpush.msra.mxu0 %v133
    %1777 = vmatpush.msra.mxu0 %v127
    %1778 = vmatpush.msra.mxu0 %v121
    %1779 = vmatpush.msra.mxu0 %v115
    %1780 = vmatpush.msra.mxu0 %v109
    %1781 = vmatpush.msra.mxu0 %v103
    %1782 = vmatpush.msra.mxu0 %v97
    %1783 = vmatpush.msra.mxu0 %v91
    %1784 = vmatpush.msra.mxu0 %v85
    %1785 = vmatpush.msra.mxu0 %v79
    %1786 = vmatpush.msra.mxu0 %v73
    %1787 = vmatpush.msra.mxu0 %v67
    %1788 = vmatpush.msra.mxu0 %v61
    %1789 = vmatpush.msra.mxu0 %v55
    %1790 = vmatmul.f32.gmra.mxu0 %v1720
    %v1791 = vpop.f32.mrf.mxu0
    %v1792 = vadd.f32 %v1724, %v1791
    %1793 = vmatmul.f32.gmra.mxu0 %v1721
    %v1794 = vpop.f32.mrf.mxu0
    %v1795 = vadd.f32 %v1724, %v1794
    %1796 = vdwg.mxu0
    %1797 = vmatpush.msra.mxu0 %v146
    %1798 = vmatpush.msra.mxu0 %v140
    %1799 = vmatpush.msra.mxu0 %v134
    %1800 = vmatpush.msra.mxu0 %v128
    %1801 = vmatpush.msra.mxu0 %v122
    %1802 = vmatpush.msra.mxu0 %v116
    %1803 = vmatpush.msra.mxu0 %v110
    %1804 = vmatpush.msra.mxu0 %v104
    %1805 = vmatpush.msra.mxu0 %v98
    %1806 = vmatpush.msra.mxu0 %v92
    %1807 = vmatpush.msra.mxu0 %v86
    %1808 = vmatpush.msra.mxu0 %v80
    %1809 = vmatpush.msra.mxu0 %v74
    %1810 = vmatpush.msra.mxu0 %v68
    %1811 = vmatpush.msra.mxu0 %v62
    %1812 = vmatpush.msra.mxu0 %v56
    %1813 = vmatmul.f32.gmra.mxu0 %v1720
    %v1814 = vpop.f32.mrf.mxu0
    %v1815 = vadd.f32 %v1725, %v1814
    %1816 = vmatmul.f32.gmra.mxu0 %v1721
    %v1817 = vpop.f32.mrf.mxu0
    %v1818 = vadd.f32 %v1725, %v1817
    %1819 = vdwg.mxu0
    %1820 = vmatpush.msra.mxu0 %v147
    %1821 = vmatpush.msra.mxu0 %v141
    %1822 = vmatpush.msra.mxu0 %v135
    %1823 = vmatpush.msra.mxu0 %v129
    %1824 = vmatpush.msra.mxu0 %v123
    %1825 = vmatpush.msra.mxu0 %v117
    %1826 = vmatpush.msra.mxu0 %v111
    %1827 = vmatpush.msra.mxu0 %v105
    %1828 = vmatpush.msra.mxu0 %v99
    %1829 = vmatpush.msra.mxu0 %v93
    %1830 = vmatpush.msra.mxu0 %v87
    %1831 = vmatpush.msra.mxu0 %v81
    %1832 = vmatpush.msra.mxu0 %v75
    %1833 = vmatpush.msra.mxu0 %v69
    %1834 = vmatpush.msra.mxu0 %v63
    %1835 = vmatpush.msra.mxu0 %v57
    %1836 = vmatmul.f32.gmra.mxu0 %v1720
    %v1837 = vpop.f32.mrf.mxu0
    %v1838 = vadd.f32 %v1726, %v1837
    %1839 = vmatmul.f32.gmra.mxu0 %v1721
    %v1840 = vpop.f32.mrf.mxu0
    %v1841 = vadd.f32 %v1726, %v1840
    %1842 = vdwg.mxu0
    %1843 = vmatpush.msra.mxu0 %v148
    %1844 = vmatpush.msra.mxu0 %v142
    %1845 = vmatpush.msra.mxu0 %v136
    %1846 = vmatpush.msra.mxu0 %v130
    %1847 = vmatpush.msra.mxu0 %v124
    %1848 = vmatpush.msra.mxu0 %v118
    %1849 = vmatpush.msra.mxu0 %v112
    %1850 = vmatpush.msra.mxu0 %v106
    %1851 = vmatpush.msra.mxu0 %v100
    %1852 = vmatpush.msra.mxu0 %v94
    %1853 = vmatpush.msra.mxu0 %v88
    %1854 = vmatpush.msra.mxu0 %v82
    %1855 = vmatpush.msra.mxu0 %v76
    %1856 = vmatpush.msra.mxu0 %v70
    %1857 = vmatpush.msra.mxu0 %v64
    %1858 = vmatpush.msra.mxu0 %v58
    %1859 = vmatmul.f32.gmra.mxu0 %v1720
    %v1860 = vpop.f32.mrf.mxu0
    %v1861 = vadd.f32 %v1727, %v1860
    %1862 = vmatmul.f32.gmra.mxu0 %v1721
    %v1863 = vpop.f32.mrf.mxu0
    %v1864 = vadd.f32 %v1727, %v1863
    %1865 = vdwg.mxu0
    %v1866 = vadd.f32 %v1746, %v1769
    %v1867 = vadd.f32 %v1866, %v1792
    %v1868 = vadd.f32 %v1867, %v1815
    %v1869 = vadd.f32 %v1868, %v1838
    %v1870 = vadd.f32 %v1869, %v1861
    %1871 = vadd.xlane.f32.xlu0 %v1870
    %v1872 = vpop.xlane.xlu0 %1871
    %v1873 = vadd.f32 %v1749, %v1772
    %v1874 = vadd.f32 %v1873, %v1795
    %v1875 = vadd.f32 %v1874, %v1818
    %v1876 = vadd.f32 %v1875, %v1841
    %v1877 = vadd.f32 %v1876, %v1864
    %1878 = vadd.xlane.f32.xlu0 %v1877
    %v1879 = vpop.xlane.xlu0 %1878
    %v1880 = vmul.f32 %v1872, %v335
    %v1881 = vmul.f32 %v1879, %v335
    %v1882 = vsub.f32 %v1746, %v1880
    %v1883 = vsub.f32 %v1769, %v1880
    %v1884 = vsub.f32 %v1792, %v1880
    %v1885 = vsub.f32 %v1815, %v1880
    %v1886 = vsub.f32 %v1838, %v1880
    %v1887 = vsub.f32 %v1861, %v1880
    %v1888 = vsub.f32 %v1749, %v1881
    %v1889 = vsub.f32 %v1772, %v1881
    %v1890 = vsub.f32 %v1795, %v1881
    %v1891 = vsub.f32 %v1818, %v1881
    %v1892 = vsub.f32 %v1841, %v1881
    %v1893 = vsub.f32 %v1864, %v1881
    %v1894 = vmul.f32 %v1882, %v1882
    %v1895 = vmul.f32 %v1883, %v1883
    %v1896 = vmul.f32 %v1884, %v1884
    %v1897 = vmul.f32 %v1885, %v1885
    %v1898 = vmul.f32 %v1886, %v1886
    %v1899 = vmul.f32 %v1887, %v1887
    %v1900 = vmul.f32 %v1888, %v1888
    %v1901 = vmul.f32 %v1889, %v1889
    %v1902 = vmul.f32 %v1890, %v1890
    %v1903 = vmul.f32 %v1891, %v1891
    %v1904 = vmul.f32 %v1892, %v1892
    %v1905 = vmul.f32 %v1893, %v1893
    %v1906 = vadd.f32 %v1894, %v1895
    %v1907 = vadd.f32 %v1906, %v1896
    %v1908 = vadd.f32 %v1907, %v1897
    %v1909 = vadd.f32 %v1908, %v1898
    %v1910 = vadd.f32 %v1909, %v1899
    %1911 = vadd.xlane.f32.xlu0 %v1910
    %v1912 = vpop.xlane.xlu0 %1911
    %v1913 = vadd.f32 %v1900, %v1901
    %v1914 = vadd.f32 %v1913, %v1902
    %v1915 = vadd.f32 %v1914, %v1903
    %v1916 = vadd.f32 %v1915, %v1904
    %v1917 = vadd.f32 %v1916, %v1905
    %1918 = vadd.xlane.f32.xlu0 %v1917
    %v1919 = vpop.xlane.xlu0 %1918
    %v1920 = vmul.f32 %v1912, %v335
    %v1921 = vmul.f32 %v1919, %v335
    %v1922 = vadd.f32 %v1920, 1e-12
    %v1923 = vadd.f32 %v1921, 1e-12
    %v1924 = vrsqrt.pop %v1922
    %v1925 = vmul.f32 %v1924, %v1922
    %v1926 = vmul.f32 %v1925, %v1924
    %v1927 = vmul.f32 0.5, %v1926
    %v1928 = vsub.f32 1.5, %v1927
    %v1929 = vmul.f32 %v1924, %v1928
    %vm1930 = vweird.f32 %v1922
    %vm1931 = vweird.f32 %v1924
    %vm1932 = vmor %vm1930, %vm1931
    %v1933 = vsel %vm1932, %v1924, %v1929
    %v1934 = vrsqrt.pop %v1923
    %v1935 = vmul.f32 %v1934, %v1923
    %v1936 = vmul.f32 %v1935, %v1934
    %v1937 = vmul.f32 0.5, %v1936
    %v1938 = vsub.f32 1.5, %v1937
    %v1939 = vmul.f32 %v1934, %v1938
    %vm1940 = vweird.f32 %v1923
    %vm1941 = vweird.f32 %v1934
    %vm1942 = vmor %vm1940, %vm1941
    %v1943 = vsel %vm1942, %v1934, %v1939
    %v1944 = vmul.f32 %v1882, %v1933
    %v1945 = vmul.f32 %v1883, %v1933
    %v1946 = vmul.f32 %v1884, %v1933
    %v1947 = vmul.f32 %v1885, %v1933
    %v1948 = vmul.f32 %v1886, %v1933
    %v1949 = vmul.f32 %v1887, %v1933
    %v1950 = vmul.f32 %v1888, %v1943
    %v1951 = vmul.f32 %v1889, %v1943
    %v1952 = vmul.f32 %v1890, %v1943
    %v1953 = vmul.f32 %v1891, %v1943
    %v1954 = vmul.f32 %v1892, %v1943
    %v1955 = vmul.f32 %v1893, %v1943
    %v1956 = vmul.f32 %v1944, %v413
    %v1957 = vmul.f32 %v1945, %v414
    %v1958 = vmul.f32 %v1946, %v415
    %v1959 = vmul.f32 %v1947, %v416
    %v1960 = vmul.f32 %v1948, %v417
    %v1961 = vmul.f32 %v1949, %v418
    %v1962 = vmul.f32 %v1950, %v413
    %v1963 = vmul.f32 %v1951, %v414
    %v1964 = vmul.f32 %v1952, %v415
    %v1965 = vmul.f32 %v1953, %v416
    %v1966 = vmul.f32 %v1954, %v417
    %v1967 = vmul.f32 %v1955, %v418
    %v1968 = vadd.f32 %v1956, %v438
    %v1969 = vadd.f32 %v1957, %v439
    %v1970 = vadd.f32 %v1958, %v440
    %v1971 = vadd.f32 %v1959, %v441
    %v1972 = vadd.f32 %v1960, %v442
    %v1973 = vadd.f32 %v1961, %v443
    %v1974 = vadd.f32 %v1962, %v438
    %v1975 = vadd.f32 %v1963, %v439
    %v1976 = vadd.f32 %v1964, %v440
    %v1977 = vadd.f32 %v1965, %v441
    %v1978 = vadd.f32 %v1966, %v442
    %v1979 = vadd.f32 %v1967, %v443
    %1980 = vset.pattern.permute.xlu0 5
    %1981 = vperm.xlu0 %1980, %v466
    %v1982 = vpop.permute.xlu0 %1981
    %1984 = vset.pattern.permute.xlu0 5
    %1985 = vperm.xlu0 %1984, %v467
    %v1986 = vpop.permute.xlu0 %1985
    %v1988 = vmul.f32 %v1968, %v1982
    %v1989 = vmul.f32 %v1969, %v1982
    %v1990 = vmul.f32 %v1970, %v1982
    %v1991 = vmul.f32 %v1971, %v1982
    %v1992 = vmul.f32 %v1972, %v1982
    %v1993 = vmul.f32 %v1973, %v1982
    %v1994 = vmul.f32 %v1974, %v1986
    %v1995 = vmul.f32 %v1975, %v1986
    %v1996 = vmul.f32 %v1976, %v1986
    %v1997 = vmul.f32 %v1977, %v1986
    %v1998 = vmul.f32 %v1978, %v1986
    %v1999 = vmul.f32 %v1979, %v1986
    %v2000 = vadd.f32 %v1698, %v1988
    %v2001 = vadd.f32 %v1699, %v1989
    %v2002 = vadd.f32 %v1700, %v1990
    %v2003 = vadd.f32 %v1701, %v1991
    %v2004 = vadd.f32 %v1702, %v1992
    %v2005 = vadd.f32 %v1703, %v1993
    %v2006 = vadd.f32 %v1704, %v1994
    %v2007 = vadd.f32 %v1705, %v1995
    %v2008 = vadd.f32 %v1706, %v1996
    %v2009 = vadd.f32 %v1707, %v1997
    %v2010 = vadd.f32 %v1708, %v1998
    %v2011 = vadd.f32 %v1709, %v1999
    %2012 = vset.pattern.permute.xlu0 6
    %2013 = vperm.xlu0 %2012, %v51
    %v2014 = vpop.permute.xlu0 %2013
    %2015 = vset.pattern.permute.xlu0 6
    %2016 = vperm.xlu0 %2015, %v52
    %v2017 = vpop.permute.xlu0 %2016
    %vm2018 = vcmp.eq.s32.totalorder %v2014, %v158
    %vm2019 = vcmp.eq.s32.totalorder %v2017, %v158
    %v2020 = vsel %vm2018, 1, 0
    %v2021 = vsel %vm2019, 1, 0
    %v2022 = vcvt.s32.f32 %v2020
    %v2023 = vcvt.s32.f32 %v2021
    %v2024 = vperm.slane %v149, 6
    %v2025 = vperm.slane %v150, 6
    %v2026 = vperm.slane %v151, 6
    %v2027 = vperm.slane %v152, 6
    %v2028 = vperm.slane %v153, 6
    %v2029 = vperm.slane %v154, 6
    %2030 = vmatpush.msra.mxu0 %v143
    %2031 = vmatpush.msra.mxu0 %v137
    %2032 = vmatpush.msra.mxu0 %v131
    %2033 = vmatpush.msra.mxu0 %v125
    %2034 = vmatpush.msra.mxu0 %v119
    %2035 = vmatpush.msra.mxu0 %v113
    %2036 = vmatpush.msra.mxu0 %v107
    %2037 = vmatpush.msra.mxu0 %v101
    %2038 = vmatpush.msra.mxu0 %v95
    %2039 = vmatpush.msra.mxu0 %v89
    %2040 = vmatpush.msra.mxu0 %v83
    %2041 = vmatpush.msra.mxu0 %v77
    %2042 = vmatpush.msra.mxu0 %v71
    %2043 = vmatpush.msra.mxu0 %v65
    %2044 = vmatpush.msra.mxu0 %v59
    %2045 = vmatpush.msra.mxu0 %v53
    %2046 = vmatmul.f32.gmra.mxu0 %v2022
    %v2047 = vpop.f32.mrf.mxu0
    %v2048 = vadd.f32 %v2024, %v2047
    %2049 = vmatmul.f32.gmra.mxu0 %v2023
    %v2050 = vpop.f32.mrf.mxu0
    %v2051 = vadd.f32 %v2024, %v2050
    %2052 = vdwg.mxu0
    %2053 = vmatpush.msra.mxu0 %v144
    %2054 = vmatpush.msra.mxu0 %v138
    %2055 = vmatpush.msra.mxu0 %v132
    %2056 = vmatpush.msra.mxu0 %v126
    %2057 = vmatpush.msra.mxu0 %v120
    %2058 = vmatpush.msra.mxu0 %v114
    %2059 = vmatpush.msra.mxu0 %v108
    %2060 = vmatpush.msra.mxu0 %v102
    %2061 = vmatpush.msra.mxu0 %v96
    %2062 = vmatpush.msra.mxu0 %v90
    %2063 = vmatpush.msra.mxu0 %v84
    %2064 = vmatpush.msra.mxu0 %v78
    %2065 = vmatpush.msra.mxu0 %v72
    %2066 = vmatpush.msra.mxu0 %v66
    %2067 = vmatpush.msra.mxu0 %v60
    %2068 = vmatpush.msra.mxu0 %v54
    %2069 = vmatmul.f32.gmra.mxu0 %v2022
    %v2070 = vpop.f32.mrf.mxu0
    %v2071 = vadd.f32 %v2025, %v2070
    %2072 = vmatmul.f32.gmra.mxu0 %v2023
    %v2073 = vpop.f32.mrf.mxu0
    %v2074 = vadd.f32 %v2025, %v2073
    %2075 = vdwg.mxu0
    %2076 = vmatpush.msra.mxu0 %v145
    %2077 = vmatpush.msra.mxu0 %v139
    %2078 = vmatpush.msra.mxu0 %v133
    %2079 = vmatpush.msra.mxu0 %v127
    %2080 = vmatpush.msra.mxu0 %v121
    %2081 = vmatpush.msra.mxu0 %v115
    %2082 = vmatpush.msra.mxu0 %v109
    %2083 = vmatpush.msra.mxu0 %v103
    %2084 = vmatpush.msra.mxu0 %v97
    %2085 = vmatpush.msra.mxu0 %v91
    %2086 = vmatpush.msra.mxu0 %v85
    %2087 = vmatpush.msra.mxu0 %v79
    %2088 = vmatpush.msra.mxu0 %v73
    %2089 = vmatpush.msra.mxu0 %v67
    %2090 = vmatpush.msra.mxu0 %v61
    %2091 = vmatpush.msra.mxu0 %v55
    %2092 = vmatmul.f32.gmra.mxu0 %v2022
    %v2093 = vpop.f32.mrf.mxu0
    %v2094 = vadd.f32 %v2026, %v2093
    %2095 = vmatmul.f32.gmra.mxu0 %v2023
    %v2096 = vpop.f32.mrf.mxu0
    %v2097 = vadd.f32 %v2026, %v2096
    %2098 = vdwg.mxu0
    %2099 = vmatpush.msra.mxu0 %v146
    %2100 = vmatpush.msra.mxu0 %v140
    %2101 = vmatpush.msra.mxu0 %v134
    %2102 = vmatpush.msra.mxu0 %v128
    %2103 = vmatpush.msra.mxu0 %v122
    %2104 = vmatpush.msra.mxu0 %v116
    %2105 = vmatpush.msra.mxu0 %v110
    %2106 = vmatpush.msra.mxu0 %v104
    %2107 = vmatpush.msra.mxu0 %v98
    %2108 = vmatpush.msra.mxu0 %v92
    %2109 = vmatpush.msra.mxu0 %v86
    %2110 = vmatpush.msra.mxu0 %v80
    %2111 = vmatpush.msra.mxu0 %v74
    %2112 = vmatpush.msra.mxu0 %v68
    %2113 = vmatpush.msra.mxu0 %v62
    %2114 = vmatpush.msra.mxu0 %v56
    %2115 = vmatmul.f32.gmra.mxu0 %v2022
    %v2116 = vpop.f32.mrf.mxu0
    %v2117 = vadd.f32 %v2027, %v2116
    %2118 = vmatmul.f32.gmra.mxu0 %v2023
    %v2119 = vpop.f32.mrf.mxu0
    %v2120 = vadd.f32 %v2027, %v2119
    %2121 = vdwg.mxu0
    %2122 = vmatpush.msra.mxu0 %v147
    %2123 = vmatpush.msra.mxu0 %v141
    %2124 = vmatpush.msra.mxu0 %v135
    %2125 = vmatpush.msra.mxu0 %v129
    %2126 = vmatpush.msra.mxu0 %v123
    %2127 = vmatpush.msra.mxu0 %v117
    %2128 = vmatpush.msra.mxu0 %v111
    %2129 = vmatpush.msra.mxu0 %v105
    %2130 = vmatpush.msra.mxu0 %v99
    %2131 = vmatpush.msra.mxu0 %v93
    %2132 = vmatpush.msra.mxu0 %v87
    %2133 = vmatpush.msra.mxu0 %v81
    %2134 = vmatpush.msra.mxu0 %v75
    %2135 = vmatpush.msra.mxu0 %v69
    %2136 = vmatpush.msra.mxu0 %v63
    %2137 = vmatpush.msra.mxu0 %v57
    %2138 = vmatmul.f32.gmra.mxu0 %v2022
    %v2139 = vpop.f32.mrf.mxu0
    %v2140 = vadd.f32 %v2028, %v2139
    %2141 = vmatmul.f32.gmra.mxu0 %v2023
    %v2142 = vpop.f32.mrf.mxu0
    %v2143 = vadd.f32 %v2028, %v2142
    %2144 = vdwg.mxu0
    %2145 = vmatpush.msra.mxu0 %v148
    %2146 = vmatpush.msra.mxu0 %v142
    %2147 = vmatpush.msra.mxu0 %v136
    %2148 = vmatpush.msra.mxu0 %v130
    %2149 = vmatpush.msra.mxu0 %v124
    %2150 = vmatpush.msra.mxu0 %v118
    %2151 = vmatpush.msra.mxu0 %v112
    %2152 = vmatpush.msra.mxu0 %v106
    %2153 = vmatpush.msra.mxu0 %v100
    %2154 = vmatpush.msra.mxu0 %v94
    %2155 = vmatpush.msra.mxu0 %v88
    %2156 = vmatpush.msra.mxu0 %v82
    %2157 = vmatpush.msra.mxu0 %v76
    %2158 = vmatpush.msra.mxu0 %v70
    %2159 = vmatpush.msra.mxu0 %v64
    %2160 = vmatpush.msra.mxu0 %v58
    %2161 = vmatmul.f32.gmra.mxu0 %v2022
    %v2162 = vpop.f32.mrf.mxu0
    %v2163 = vadd.f32 %v2029, %v2162
    %2164 = vmatmul.f32.gmra.mxu0 %v2023
    %v2165 = vpop.f32.mrf.mxu0
    %v2166 = vadd.f32 %v2029, %v2165
    %2167 = vdwg.mxu0
    %v2168 = vadd.f32 %v2048, %v2071
    %v2169 = vadd.f32 %v2168, %v2094
    %v2170 = vadd.f32 %v2169, %v2117
    %v2171 = vadd.f32 %v2170, %v2140
    %v2172 = vadd.f32 %v2171, %v2163
    %2173 = vadd.xlane.f32.xlu0 %v2172
    %v2174 = vpop.xlane.xlu0 %2173
    %v2175 = vadd.f32 %v2051, %v2074
    %v2176 = vadd.f32 %v2175, %v2097
    %v2177 = vadd.f32 %v2176, %v2120
    %v2178 = vadd.f32 %v2177, %v2143
    %v2179 = vadd.f32 %v2178, %v2166
    %2180 = vadd.xlane.f32.xlu0 %v2179
    %v2181 = vpop.xlane.xlu0 %2180
    %v2182 = vmul.f32 %v2174, %v335
    %v2183 = vmul.f32 %v2181, %v335
    %v2184 = vsub.f32 %v2048, %v2182
    %v2185 = vsub.f32 %v2071, %v2182
    %v2186 = vsub.f32 %v2094, %v2182
    %v2187 = vsub.f32 %v2117, %v2182
    %v2188 = vsub.f32 %v2140, %v2182
    %v2189 = vsub.f32 %v2163, %v2182
    %v2190 = vsub.f32 %v2051, %v2183
    %v2191 = vsub.f32 %v2074, %v2183
    %v2192 = vsub.f32 %v2097, %v2183
    %v2193 = vsub.f32 %v2120, %v2183
    %v2194 = vsub.f32 %v2143, %v2183
    %v2195 = vsub.f32 %v2166, %v2183
    %v2196 = vmul.f32 %v2184, %v2184
    %v2197 = vmul.f32 %v2185, %v2185
    %v2198 = vmul.f32 %v2186, %v2186
    %v2199 = vmul.f32 %v2187, %v2187
    %v2200 = vmul.f32 %v2188, %v2188
    %v2201 = vmul.f32 %v2189, %v2189
    %v2202 = vmul.f32 %v2190, %v2190
    %v2203 = vmul.f32 %v2191, %v2191
    %v2204 = vmul.f32 %v2192, %v2192
    %v2205 = vmul.f32 %v2193, %v2193
    %v2206 = vmul.f32 %v2194, %v2194
    %v2207 = vmul.f32 %v2195, %v2195
    %v2208 = vadd.f32 %v2196, %v2197
    %v2209 = vadd.f32 %v2208, %v2198
    %v2210 = vadd.f32 %v2209, %v2199
    %v2211 = vadd.f32 %v2210, %v2200
    %v2212 = vadd.f32 %v2211, %v2201
    %2213 = vadd.xlane.f32.xlu0 %v2212
    %v2214 = vpop.xlane.xlu0 %2213
    %v2215 = vadd.f32 %v2202, %v2203
    %v2216 = vadd.f32 %v2215, %v2204
    %v2217 = vadd.f32 %v2216, %v2205
    %v2218 = vadd.f32 %v2217, %v2206
    %v2219 = vadd.f32 %v2218, %v2207
    %2220 = vadd.xlane.f32.xlu0 %v2219
    %v2221 = vpop.xlane.xlu0 %2220
    %v2222 = vmul.f32 %v2214, %v335
    %v2223 = vmul.f32 %v2221, %v335
    %v2224 = vadd.f32 %v2222, 1e-12
    %v2225 = vadd.f32 %v2223, 1e-12
    %v2226 = vrsqrt.pop %v2224
    %v2227 = vmul.f32 %v2226, %v2224
    %v2228 = vmul.f32 %v2227, %v2226
    %v2229 = vmul.f32 0.5, %v2228
    %v2230 = vsub.f32 1.5, %v2229
    %v2231 = vmul.f32 %v2226, %v2230
    %vm2232 = vweird.f32 %v2224
    %vm2233 = vweird.f32 %v2226
    %vm2234 = vmor %vm2232, %vm2233
    %v2235 = vsel %vm2234, %v2226, %v2231
    %v2236 = vrsqrt.pop %v2225
    %v2237 = vmul.f32 %v2236, %v2225
    %v2238 = vmul.f32 %v2237, %v2236
    %v2239 = vmul.f32 0.5, %v2238
    %v2240 = vsub.f32 1.5, %v2239
    %v2241 = vmul.f32 %v2236, %v2240
    %vm2242 = vweird.f32 %v2225
    %vm2243 = vweird.f32 %v2236
    %vm2244 = vmor %vm2242, %vm2243
    %v2245 = vsel %vm2244, %v2236, %v2241
    %v2246 = vmul.f32 %v2184, %v2235
    %v2247 = vmul.f32 %v2185, %v2235
    %v2248 = vmul.f32 %v2186, %v2235
    %v2249 = vmul.f32 %v2187, %v2235
    %v2250 = vmul.f32 %v2188, %v2235
    %v2251 = vmul.f32 %v2189, %v2235
    %v2252 = vmul.f32 %v2190, %v2245
    %v2253 = vmul.f32 %v2191, %v2245
    %v2254 = vmul.f32 %v2192, %v2245
    %v2255 = vmul.f32 %v2193, %v2245
    %v2256 = vmul.f32 %v2194, %v2245
    %v2257 = vmul.f32 %v2195, %v2245
    %v2258 = vmul.f32 %v2246, %v413
    %v2259 = vmul.f32 %v2247, %v414
    %v2260 = vmul.f32 %v2248, %v415
    %v2261 = vmul.f32 %v2249, %v416
    %v2262 = vmul.f32 %v2250, %v417
    %v2263 = vmul.f32 %v2251, %v418
    %v2264 = vmul.f32 %v2252, %v413
    %v2265 = vmul.f32 %v2253, %v414
    %v2266 = vmul.f32 %v2254, %v415
    %v2267 = vmul.f32 %v2255, %v416
    %v2268 = vmul.f32 %v2256, %v417
    %v2269 = vmul.f32 %v2257, %v418
    %v2270 = vadd.f32 %v2258, %v438
    %v2271 = vadd.f32 %v2259, %v439
    %v2272 = vadd.f32 %v2260, %v440
    %v2273 = vadd.f32 %v2261, %v441
    %v2274 = vadd.f32 %v2262, %v442
    %v2275 = vadd.f32 %v2263, %v443
    %v2276 = vadd.f32 %v2264, %v438
    %v2277 = vadd.f32 %v2265, %v439
    %v2278 = vadd.f32 %v2266, %v440
    %v2279 = vadd.f32 %v2267, %v441
    %v2280 = vadd.f32 %v2268, %v442
    %v2281 = vadd.f32 %v2269, %v443
    %2282 = vset.pattern.permute.xlu0 6
    %2283 = vperm.xlu0 %2282, %v466
    %v2284 = vpop.permute.xlu0 %2283
    %2286 = vset.pattern.permute.xlu0 6
    %2287 = vperm.xlu0 %2286, %v467
    %v2288 = vpop.permute.xlu0 %2287
    %v2290 = vmul.f32 %v2270, %v2284
    %v2291 = vmul.f32 %v2271, %v2284
    %v2292 = vmul.f32 %v2272, %v2284
    %v2293 = vmul.f32 %v2273, %v2284
    %v2294 = vmul.f32 %v2274, %v2284
    %v2295 = vmul.f32 %v2275, %v2284
    %v2296 = vmul.f32 %v2276, %v2288
    %v2297 = vmul.f32 %v2277, %v2288
    %v2298 = vmul.f32 %v2278, %v2288
    %v2299 = vmul.f32 %v2279, %v2288
    %v2300 = vmul.f32 %v2280, %v2288
    %v2301 = vmul.f32 %v2281, %v2288
    %v2302 = vadd.f32 %v2000, %v2290
    %v2303 = vadd.f32 %v2001, %v2291
    %v2304 = vadd.f32 %v2002, %v2292
    %v2305 = vadd.f32 %v2003, %v2293
    %v2306 = vadd.f32 %v2004, %v2294
    %v2307 = vadd.f32 %v2005, %v2295
    %v2308 = vadd.f32 %v2006, %v2296
    %v2309 = vadd.f32 %v2007, %v2297
    %v2310 = vadd.f32 %v2008, %v2298
    %v2311 = vadd.f32 %v2009, %v2299
    %v2312 = vadd.f32 %v2010, %v2300
    %v2313 = vadd.f32 %v2011, %v2301
    %2314 = vset.pattern.permute.xlu0 7
    %2315 = vperm.xlu0 %2314, %v51
    %v2316 = vpop.permute.xlu0 %2315
    %2317 = vset.pattern.permute.xlu0 7
    %2318 = vperm.xlu0 %2317, %v52
    %v2319 = vpop.permute.xlu0 %2318
    %vm2320 = vcmp.eq.s32.totalorder %v2316, %v158
    %vm2321 = vcmp.eq.s32.totalorder %v2319, %v158
    %v2322 = vsel %vm2320, 1, 0
    %v2323 = vsel %vm2321, 1, 0
    %v2324 = vcvt.s32.f32 %v2322
    %v2325 = vcvt.s32.f32 %v2323
    %v2326 = vperm.slane %v149, 7
    %v2327 = vperm.slane %v150, 7
    %v2328 = vperm.slane %v151, 7
    %v2329 = vperm.slane %v152, 7
    %v2330 = vperm.slane %v153, 7
    %v2331 = vperm.slane %v154, 7
    %2332 = vmatpush.msra.mxu0 %v143
    %2333 = vmatpush.msra.mxu0 %v137
    %2334 = vmatpush.msra.mxu0 %v131
    %2335 = vmatpush.msra.mxu0 %v125
    %2336 = vmatpush.msra.mxu0 %v119
    %2337 = vmatpush.msra.mxu0 %v113
    %2338 = vmatpush.msra.mxu0 %v107
    %2339 = vmatpush.msra.mxu0 %v101
    %2340 = vmatpush.msra.mxu0 %v95
    %2341 = vmatpush.msra.mxu0 %v89
    %2342 = vmatpush.msra.mxu0 %v83
    %2343 = vmatpush.msra.mxu0 %v77
    %2344 = vmatpush.msra.mxu0 %v71
    %2345 = vmatpush.msra.mxu0 %v65
    %2346 = vmatpush.msra.mxu0 %v59
    %2347 = vmatpush.msra.mxu0 %v53
    %2348 = vmatmul.f32.gmra.mxu0 %v2324
    %v2349 = vpop.f32.mrf.mxu0
    %v2350 = vadd.f32 %v2326, %v2349
    %2351 = vmatmul.f32.gmra.mxu0 %v2325
    %v2352 = vpop.f32.mrf.mxu0
    %v2353 = vadd.f32 %v2326, %v2352
    %2354 = vdwg.mxu0
    %2355 = vmatpush.msra.mxu0 %v144
    %2356 = vmatpush.msra.mxu0 %v138
    %2357 = vmatpush.msra.mxu0 %v132
    %2358 = vmatpush.msra.mxu0 %v126
    %2359 = vmatpush.msra.mxu0 %v120
    %2360 = vmatpush.msra.mxu0 %v114
    %2361 = vmatpush.msra.mxu0 %v108
    %2362 = vmatpush.msra.mxu0 %v102
    %2363 = vmatpush.msra.mxu0 %v96
    %2364 = vmatpush.msra.mxu0 %v90
    %2365 = vmatpush.msra.mxu0 %v84
    %2366 = vmatpush.msra.mxu0 %v78
    %2367 = vmatpush.msra.mxu0 %v72
    %2368 = vmatpush.msra.mxu0 %v66
    %2369 = vmatpush.msra.mxu0 %v60
    %2370 = vmatpush.msra.mxu0 %v54
    %2371 = vmatmul.f32.gmra.mxu0 %v2324
    %v2372 = vpop.f32.mrf.mxu0
    %v2373 = vadd.f32 %v2327, %v2372
    %2374 = vmatmul.f32.gmra.mxu0 %v2325
    %v2375 = vpop.f32.mrf.mxu0
    %v2376 = vadd.f32 %v2327, %v2375
    %2377 = vdwg.mxu0
    %2378 = vmatpush.msra.mxu0 %v145
    %2379 = vmatpush.msra.mxu0 %v139
    %2380 = vmatpush.msra.mxu0 %v133
    %2381 = vmatpush.msra.mxu0 %v127
    %2382 = vmatpush.msra.mxu0 %v121
    %2383 = vmatpush.msra.mxu0 %v115
    %2384 = vmatpush.msra.mxu0 %v109
    %2385 = vmatpush.msra.mxu0 %v103
    %2386 = vmatpush.msra.mxu0 %v97
    %2387 = vmatpush.msra.mxu0 %v91
    %2388 = vmatpush.msra.mxu0 %v85
    %2389 = vmatpush.msra.mxu0 %v79
    %2390 = vmatpush.msra.mxu0 %v73
    %2391 = vmatpush.msra.mxu0 %v67
    %2392 = vmatpush.msra.mxu0 %v61
    %2393 = vmatpush.msra.mxu0 %v55
    %2394 = vmatmul.f32.gmra.mxu0 %v2324
    %v2395 = vpop.f32.mrf.mxu0
    %v2396 = vadd.f32 %v2328, %v2395
    %2397 = vmatmul.f32.gmra.mxu0 %v2325
    %v2398 = vpop.f32.mrf.mxu0
    %v2399 = vadd.f32 %v2328, %v2398
    %2400 = vdwg.mxu0
    %2401 = vmatpush.msra.mxu0 %v146
    %2402 = vmatpush.msra.mxu0 %v140
    %2403 = vmatpush.msra.mxu0 %v134
    %2404 = vmatpush.msra.mxu0 %v128
    %2405 = vmatpush.msra.mxu0 %v122
    %2406 = vmatpush.msra.mxu0 %v116
    %2407 = vmatpush.msra.mxu0 %v110
    %2408 = vmatpush.msra.mxu0 %v104
    %2409 = vmatpush.msra.mxu0 %v98
    %2410 = vmatpush.msra.mxu0 %v92
    %2411 = vmatpush.msra.mxu0 %v86
    %2412 = vmatpush.msra.mxu0 %v80
    %2413 = vmatpush.msra.mxu0 %v74
    %2414 = vmatpush.msra.mxu0 %v68
    %2415 = vmatpush.msra.mxu0 %v62
    %2416 = vmatpush.msra.mxu0 %v56
    %2417 = vmatmul.f32.gmra.mxu0 %v2324
    %v2418 = vpop.f32.mrf.mxu0
    %v2419 = vadd.f32 %v2329, %v2418
    %2420 = vmatmul.f32.gmra.mxu0 %v2325
    %v2421 = vpop.f32.mrf.mxu0
    %v2422 = vadd.f32 %v2329, %v2421
    %2423 = vdwg.mxu0
    %2424 = vmatpush.msra.mxu0 %v147
    %2425 = vmatpush.msra.mxu0 %v141
    %2426 = vmatpush.msra.mxu0 %v135
    %2427 = vmatpush.msra.mxu0 %v129
    %2428 = vmatpush.msra.mxu0 %v123
    %2429 = vmatpush.msra.mxu0 %v117
    %2430 = vmatpush.msra.mxu0 %v111
    %2431 = vmatpush.msra.mxu0 %v105
    %2432 = vmatpush.msra.mxu0 %v99
    %2433 = vmatpush.msra.mxu0 %v93
    %2434 = vmatpush.msra.mxu0 %v87
    %2435 = vmatpush.msra.mxu0 %v81
    %2436 = vmatpush.msra.mxu0 %v75
    %2437 = vmatpush.msra.mxu0 %v69
    %2438 = vmatpush.msra.mxu0 %v63
    %2439 = vmatpush.msra.mxu0 %v57
    %2440 = vmatmul.f32.gmra.mxu0 %v2324
    %v2441 = vpop.f32.mrf.mxu0
    %v2442 = vadd.f32 %v2330, %v2441
    %2443 = vmatmul.f32.gmra.mxu0 %v2325
    %v2444 = vpop.f32.mrf.mxu0
    %v2445 = vadd.f32 %v2330, %v2444
    %2446 = vdwg.mxu0
    %2447 = vmatpush.msra.mxu0 %v148
    %2448 = vmatpush.msra.mxu0 %v142
    %2449 = vmatpush.msra.mxu0 %v136
    %2450 = vmatpush.msra.mxu0 %v130
    %2451 = vmatpush.msra.mxu0 %v124
    %2452 = vmatpush.msra.mxu0 %v118
    %2453 = vmatpush.msra.mxu0 %v112
    %2454 = vmatpush.msra.mxu0 %v106
    %2455 = vmatpush.msra.mxu0 %v100
    %2456 = vmatpush.msra.mxu0 %v94
    %2457 = vmatpush.msra.mxu0 %v88
    %2458 = vmatpush.msra.mxu0 %v82
    %2459 = vmatpush.msra.mxu0 %v76
    %2460 = vmatpush.msra.mxu0 %v70
    %2461 = vmatpush.msra.mxu0 %v64
    %2462 = vmatpush.msra.mxu0 %v58
    %2463 = vmatmul.f32.gmra.mxu0 %v2324
    %v2464 = vpop.f32.mrf.mxu0
    %v2465 = vadd.f32 %v2331, %v2464
    %2466 = vmatmul.f32.gmra.mxu0 %v2325
    %v2467 = vpop.f32.mrf.mxu0
    %v2468 = vadd.f32 %v2331, %v2467
    %2469 = vdwg.mxu0
    %v2470 = vadd.f32 %v2350, %v2373
    %v2471 = vadd.f32 %v2470, %v2396
    %v2472 = vadd.f32 %v2471, %v2419
    %v2473 = vadd.f32 %v2472, %v2442
    %v2474 = vadd.f32 %v2473, %v2465
    %2475 = vadd.xlane.f32.xlu0 %v2474
    %v2476 = vpop.xlane.xlu0 %2475
    %v2477 = vadd.f32 %v2353, %v2376
    %v2478 = vadd.f32 %v2477, %v2399
    %v2479 = vadd.f32 %v2478, %v2422
    %v2480 = vadd.f32 %v2479, %v2445
    %v2481 = vadd.f32 %v2480, %v2468
    %2482 = vadd.xlane.f32.xlu0 %v2481
    %v2483 = vpop.xlane.xlu0 %2482
    %v2484 = vmul.f32 %v2476, %v335
    %v2485 = vmul.f32 %v2483, %v335
    %v2486 = vsub.f32 %v2350, %v2484
    %v2487 = vsub.f32 %v2373, %v2484
    %v2488 = vsub.f32 %v2396, %v2484
    %v2489 = vsub.f32 %v2419, %v2484
    %v2490 = vsub.f32 %v2442, %v2484
    %v2491 = vsub.f32 %v2465, %v2484
    %v2492 = vsub.f32 %v2353, %v2485
    %v2493 = vsub.f32 %v2376, %v2485
    %v2494 = vsub.f32 %v2399, %v2485
    %v2495 = vsub.f32 %v2422, %v2485
    %v2496 = vsub.f32 %v2445, %v2485
    %v2497 = vsub.f32 %v2468, %v2485
    %v2498 = vmul.f32 %v2486, %v2486
    %v2499 = vmul.f32 %v2487, %v2487
    %v2500 = vmul.f32 %v2488, %v2488
    %v2501 = vmul.f32 %v2489, %v2489
    %v2502 = vmul.f32 %v2490, %v2490
    %v2503 = vmul.f32 %v2491, %v2491
    %v2504 = vmul.f32 %v2492, %v2492
    %v2505 = vmul.f32 %v2493, %v2493
    %v2506 = vmul.f32 %v2494, %v2494
    %v2507 = vmul.f32 %v2495, %v2495
    %v2508 = vmul.f32 %v2496, %v2496
    %v2509 = vmul.f32 %v2497, %v2497
    %v2510 = vadd.f32 %v2498, %v2499
    %v2511 = vadd.f32 %v2510, %v2500
    %v2512 = vadd.f32 %v2511, %v2501
    %v2513 = vadd.f32 %v2512, %v2502
    %v2514 = vadd.f32 %v2513, %v2503
    %2515 = vadd.xlane.f32.xlu0 %v2514
    %v2516 = vpop.xlane.xlu0 %2515
    %v2517 = vadd.f32 %v2504, %v2505
    %v2518 = vadd.f32 %v2517, %v2506
    %v2519 = vadd.f32 %v2518, %v2507
    %v2520 = vadd.f32 %v2519, %v2508
    %v2521 = vadd.f32 %v2520, %v2509
    %2522 = vadd.xlane.f32.xlu0 %v2521
    %v2523 = vpop.xlane.xlu0 %2522
    %v2524 = vmul.f32 %v2516, %v335
    %v2525 = vmul.f32 %v2523, %v335
    %v2526 = vadd.f32 %v2524, 1e-12
    %v2527 = vadd.f32 %v2525, 1e-12
    %v2528 = vrsqrt.pop %v2526
    %v2529 = vmul.f32 %v2528, %v2526
    %v2530 = vmul.f32 %v2529, %v2528
    %v2531 = vmul.f32 0.5, %v2530
    %v2532 = vsub.f32 1.5, %v2531
    %v2533 = vmul.f32 %v2528, %v2532
    %vm2534 = vweird.f32 %v2526
    %vm2535 = vweird.f32 %v2528
    %vm2536 = vmor %vm2534, %vm2535
    %v2537 = vsel %vm2536, %v2528, %v2533
    %v2538 = vrsqrt.pop %v2527
    %v2539 = vmul.f32 %v2538, %v2527
    %v2540 = vmul.f32 %v2539, %v2538
    %v2541 = vmul.f32 0.5, %v2540
    %v2542 = vsub.f32 1.5, %v2541
    %v2543 = vmul.f32 %v2538, %v2542
    %vm2544 = vweird.f32 %v2527
    %vm2545 = vweird.f32 %v2538
    %vm2546 = vmor %vm2544, %vm2545
    %v2547 = vsel %vm2546, %v2538, %v2543
    %v2548 = vmul.f32 %v2486, %v2537
    %v2549 = vmul.f32 %v2487, %v2537
    %v2550 = vmul.f32 %v2488, %v2537
    %v2551 = vmul.f32 %v2489, %v2537
    %v2552 = vmul.f32 %v2490, %v2537
    %v2553 = vmul.f32 %v2491, %v2537
    %v2554 = vmul.f32 %v2492, %v2547
    %v2555 = vmul.f32 %v2493, %v2547
    %v2556 = vmul.f32 %v2494, %v2547
    %v2557 = vmul.f32 %v2495, %v2547
    %v2558 = vmul.f32 %v2496, %v2547
    %v2559 = vmul.f32 %v2497, %v2547
    %v2560 = vmul.f32 %v2548, %v413
    %v2561 = vmul.f32 %v2549, %v414
    %v2562 = vmul.f32 %v2550, %v415
    %v2563 = vmul.f32 %v2551, %v416
    %v2564 = vmul.f32 %v2552, %v417
    %v2565 = vmul.f32 %v2553, %v418
    %v2566 = vmul.f32 %v2554, %v413
    %v2567 = vmul.f32 %v2555, %v414
    %v2568 = vmul.f32 %v2556, %v415
    %v2569 = vmul.f32 %v2557, %v416
    %v2570 = vmul.f32 %v2558, %v417
    %v2571 = vmul.f32 %v2559, %v418
    %v2572 = vadd.f32 %v2560, %v438
    %v2573 = vadd.f32 %v2561, %v439
    %v2574 = vadd.f32 %v2562, %v440
    %v2575 = vadd.f32 %v2563, %v441
    %v2576 = vadd.f32 %v2564, %v442
    %v2577 = vadd.f32 %v2565, %v443
    %v2578 = vadd.f32 %v2566, %v438
    %v2579 = vadd.f32 %v2567, %v439
    %v2580 = vadd.f32 %v2568, %v440
    %v2581 = vadd.f32 %v2569, %v441
    %v2582 = vadd.f32 %v2570, %v442
    %v2583 = vadd.f32 %v2571, %v443
    %2584 = vset.pattern.permute.xlu0 7
    %2585 = vperm.xlu0 %2584, %v466
    %v2586 = vpop.permute.xlu0 %2585
    %2588 = vset.pattern.permute.xlu0 7
    %2589 = vperm.xlu0 %2588, %v467
    %v2590 = vpop.permute.xlu0 %2589
    %v2592 = vmul.f32 %v2572, %v2586
    %v2593 = vmul.f32 %v2573, %v2586
    %v2594 = vmul.f32 %v2574, %v2586
    %v2595 = vmul.f32 %v2575, %v2586
    %v2596 = vmul.f32 %v2576, %v2586
    %v2597 = vmul.f32 %v2577, %v2586
    %v2598 = vmul.f32 %v2578, %v2590
    %v2599 = vmul.f32 %v2579, %v2590
    %v2600 = vmul.f32 %v2580, %v2590
    %v2601 = vmul.f32 %v2581, %v2590
    %v2602 = vmul.f32 %v2582, %v2590
    %v2603 = vmul.f32 %v2583, %v2590
    %v2604 = vadd.f32 %v2302, %v2592
    %v2605 = vadd.f32 %v2303, %v2593
    %v2606 = vadd.f32 %v2304, %v2594
    %v2607 = vadd.f32 %v2305, %v2595
    %v2608 = vadd.f32 %v2306, %v2596
    %v2609 = vadd.f32 %v2307, %v2597
    %v2610 = vadd.f32 %v2308, %v2598
    %v2611 = vadd.f32 %v2309, %v2599
    %v2612 = vadd.f32 %v2310, %v2600
    %v2613 = vadd.f32 %v2311, %v2601
    %v2614 = vadd.f32 %v2312, %v2602
    %v2615 = vadd.f32 %v2313, %v2603
    %v2616 = vpack.c.bf16 %v2605, %v2604
    %v2617 = vpack.c.bf16 %v2607, %v2606
    %v2618 = vpack.c.bf16 %v2609, %v2608
    %v2619 = vpack.c.bf16 %v2611, %v2610
    %v2620 = vpack.c.bf16 %v2613, %v2612
    %v2621 = vpack.c.bf16 %v2615, %v2614
    %2622 = vst [vmem:[#allocation7] sm:$0xff] %v2616
    %2623 = vst [vmem:[#allocation7 + $0x8] sm:$0xff] %v2617
    %2624 = vst [vmem:[#allocation7 + $0x10] sm:$0xff] %v2618
    %2625 = vst [vmem:[#allocation7 + $0x18] sm:$0xff] %v2619
    %2626 = vst [vmem:[#allocation7 + $0x20] sm:$0xff] %v2620
    %2627 = vst [vmem:[#allocation7 + $0x28] sm:$0xff] %v2621
    // Predicated region
    $region30: #{tpu_custom_call.1} parent=1 // pred_check
      _
    $region31: #{tpu_custom_call.1} parent=1 // pred_check_branch
      %2629 = sbr.rel (0) target = $region33
    $region32: #{tpu_custom_call.1} parent=1 // pred_region
      %2631 = vsyncadd [#allocation4], 0
      %s2632 = sshll.u32 [#allocation7], 4
      %s2633 = int_to_ptr.vmem [resolvable:$true] %s2632
      %s2634 = sshll.u32 %s5, 4
      %s2635 = int_to_ptr.hbm [resolvable:$true] %s2634
      %2640 = dma.vmem_to_hbm [thread:$0]  %s2633, 768, %s2635, [#allocation4], 384, 384, 24
    $region33: #{tpu_custom_call.1} parent=1 // pred_fallthru
      _
    // Predicated region
    $region34: #{tpu_custom_call.1} parent=1 // pred_check
      _
    $region35: #{tpu_custom_call.1} parent=1 // pred_check_branch
      %2642 = sbr.rel (0) target = $region37
    $region36: #{tpu_custom_call.1} parent=1 // pred_region
      %2644 = dma.done [#allocation4], 768
    $region37: #{tpu_custom_call.1} parent=1 // pred_fallthru
      _
    %2645 = vsyncpa [#allocation3], 1
    %2646 = vsyncpa [#allocation6], 1
    %2647 = vsyncpa [#allocation4], 1

</llo_original>
